<compile_context>
chip_gen: v5e
topology: v5e:2x2
jax: 0.10.0
libtpu: 0.0.40
codegen_flags: <defaults>
</compile_context>

<pallas_src>
import jax
import jax.numpy as jnp
from jax import lax
from jax.experimental import pallas as pl
from jax.experimental.pallas import tpu as pltpu


def _make_gru_kernel(T, K, D, H, L):
    """Kernel for L stacked GRU cells + output linear, whole sequence per call."""
    G = 3 * H

    def kernel(*refs):
        idx = 0
        x_ref = refs[idx]; idx += 1            # (T*K, D)   time-major, flattened
        h0_ref = refs[idx]; idx += 1           # (L, K, H)
        wi0_ref = refs[idx]; idx += 1          # (D, 3H)    layer-0 input weights
        bi0_ref = refs[idx]; idx += 1          # (1, 3H)    [b_ir+b_hr | b_iz+b_hz | b_in]
        wh_ref = refs[idx]; idx += 1           # (L, H, 3H) hidden weights
        if L > 1:
            wi_rest_ref = refs[idx]; idx += 1  # (L-1, H, 3H)
            bi_rest_ref = refs[idx]; idx += 1  # (L-1, 1, 3H)
        bhn_ref = refs[idx]; idx += 1          # (L, 1, H)  b_hn per layer
        wout_ref = refs[idx]; idx += 1         # (H, D)
        bout_ref = refs[idx]; idx += 1         # (1, D)
        out_ref = refs[idx]; idx += 1          # (T*K, D)
        rnn_out_ref = refs[idx]; idx += 1      # (T*K, H)
        hN_ref = refs[idx]; idx += 1           # (L, K, H)
        gi0_s = refs[idx]; idx += 1            # VMEM scratch (T*K, 3H)

        # --- Non-recurrent: layer-0 input projection batched over all T*K rows.
        gi0_s[...] = (
            jnp.dot(x_ref[...], wi0_ref[...], preferred_element_type=jnp.float32)
            + bi0_ref[...])

        # Hoist loop-invariant weight / bias loads out of the recurrence.
        wh = [wh_ref[l] for l in range(L)]                         # each (H, 3H)
        bhn = [bhn_ref[l] for l in range(L)]                       # each (1, H)
        if L > 1:
            wi_rest = [wi_rest_ref[l] for l in range(L - 1)]       # each (H, 3H)
            bi_rest = [bi_rest_ref[l] for l in range(L - 1)]       # each (1, 3H)

        # Initial hidden state per layer.
        h = [h0_ref[l] for l in range(L)]                          # each (K, H)

        # --- Recurrence: static Python unroll over T -> all row slices static.
        for t in range(T):
            row = pl.ds(t * K, K)                                  # static start
            inp = None
            for l in range(L):
                h_prev = h[l]                                      # (K, H)
                if l == 0:
                    gi = gi0_s[row, :]                             # (K, 3H) precomputed
                else:
                    gi = (jnp.dot(inp, wi_rest[l - 1],
                                  preferred_element_type=jnp.float32)
                          + bi_rest[l - 1])
                gh = jnp.dot(h_prev, wh[l],
                             preferred_element_type=jnp.float32)   # (K, 3H)

                # PyTorch GRUCell (input-side biases already merged into gi):
                #   r = sigmoid(gi_r + gh_r) ; z = sigmoid(gi_z + gh_z)
                #   n = tanh(gi_n + r * (gh_n + b_hn)) ; h' = (1-z)*n + z*h
                rz = jax.nn.sigmoid(gi[:, :2 * H] + gh[:, :2 * H])  # one fused sigmoid
                r = rz[:, :H]
                z = rz[:, H:]
                n = jnp.tanh(gi[:, 2 * H:] + r * (gh[:, 2 * H:] + bhn[l]))
                h_new = n + z * (h_prev - n)                       # == (1-z)*n + z*h
                h[l] = h_new
                inp = h_new

            rnn_out_ref[row, :] = inp                              # last layer output

        for l in range(L):
            hN_ref[l] = h[l]

        # --- Non-recurrent: output Linear batched over all T*K rows (lane-dense slab).
        out_ref[...] = (
            jnp.dot(rnn_out_ref[...], wout_ref[...], preferred_element_type=jnp.float32)
            + bout_ref[...])

    return kernel


def rnn_forward(inputs, init_hidden_state, params):
    """Pallas equivalent of rnn_model.forward_ (GRU cells, is_iterative_forecasting=False)."""
    K, T, D = inputs.shape
    L = len(params["layers"])
    H = params["layers"][0]["w_hr"].shape[0]
    G = 3 * H

    # Glue (XLA side): time-major flatten + hidden transpose (same as the PyTorch module).
    x_flat = jnp.transpose(inputs, (1, 0, 2)).reshape(T * K, D).astype(jnp.float32)
    h0 = jnp.transpose(init_hidden_state, (1, 0, 2)).astype(jnp.float32)    # (L, K, H)

    # Pack weights: fused gate matrices [r|z|n] per layer.
    lp0 = params["layers"][0]
    wi0 = jnp.concatenate([lp0["w_ir"], lp0["w_iz"], lp0["w_in"]], axis=1)  # (D, 3H)
    bi0 = jnp.concatenate([lp0["b_r"], lp0["b_z"], lp0["b_in"]], axis=1)    # (1, 3H)
    wh = jnp.stack(
        [jnp.concatenate([lp["w_hr"], lp["w_hz"], lp["w_hn"]], axis=1)
         for lp in params["layers"]], axis=0)                               # (L, H, 3H)
    bhn = jnp.stack([lp["b_hn"] for lp in params["layers"]], axis=0)        # (L, 1, H)

    operands = [x_flat, h0, wi0, bi0, wh]
    in_specs = [
        pl.BlockSpec((T * K, D), lambda i: (0, 0)),
        pl.BlockSpec((L, K, H), lambda i: (0, 0, 0)),
        pl.BlockSpec((D, G), lambda i: (0, 0)),
        pl.BlockSpec((1, G), lambda i: (0, 0)),
        pl.BlockSpec((L, H, G), lambda i: (0, 0, 0)),
    ]
    if L > 1:
        wi_rest = jnp.stack(
            [jnp.concatenate([lp["w_ir"], lp["w_iz"], lp["w_in"]], axis=1)
             for lp in params["layers"][1:]], axis=0)                       # (L-1, H, 3H)
        bi_rest = jnp.stack(
            [jnp.concatenate([lp["b_r"], lp["b_z"], lp["b_in"]], axis=1)
             for lp in params["layers"][1:]], axis=0)                       # (L-1, 1, 3H)
        operands += [wi_rest, bi_rest]
        in_specs += [pl.BlockSpec((L - 1, H, G), lambda i: (0, 0, 0)),
                     pl.BlockSpec((L - 1, 1, G), lambda i: (0, 0, 0))]
    operands += [bhn, params["w_out"], params["b_out"]]
    in_specs += [pl.BlockSpec((L, 1, H), lambda i: (0, 0, 0)),
                 pl.BlockSpec((H, D), lambda i: (0, 0)),
                 pl.BlockSpec((1, D), lambda i: (0, 0))]

    out_shape = (
        jax.ShapeDtypeStruct((T * K, D), jnp.float32),   # outputs (time-major, flat)
        jax.ShapeDtypeStruct((T * K, H), jnp.float32),   # rnn_outputs (time-major, flat)
        jax.ShapeDtypeStruct((L, K, H), jnp.float32),    # next hidden state
    )
    out_specs = (
        pl.BlockSpec((T * K, D), lambda i: (0, 0)),
        pl.BlockSpec((T * K, H), lambda i: (0, 0)),
        pl.BlockSpec((L, K, H), lambda i: (0, 0, 0)),
    )

    out_flat, rnn_flat, h_final = pl.pallas_call(
        _make_gru_kernel(T, K, D, H, L),
        out_shape=out_shape,
        grid_spec=pltpu.PrefetchScalarGridSpec(
            num_scalar_prefetch=0,
            grid=(1,),                           # whole sequence handled in one kernel call
            in_specs=in_specs,
            out_specs=out_specs,
            scratch_shapes=[pltpu.VMEM((T * K, G), jnp.float32)],
        ),
        compiler_params=pltpu.CompilerParams(
            dimension_semantics=("arbitrary",)),
    )(*operands)

    outputs = jnp.transpose(out_flat.reshape(T, K, D), (1, 0, 2))     # (K, T, D)
    rnn_outputs = jnp.transpose(rnn_flat.reshape(T, K, H), (1, 0, 2))  # (K, T, H)
    next_hidden = jnp.transpose(h_final, (1, 0, 2))                    # (K, L, H)
    return outputs, next_hidden, rnn_outputs


def rnn_forward_ref(inputs, init_hidden_state, params):
    """Pure-JAX reference (mirrors the PyTorch GRUCell math) for validation."""
    K, T, D = inputs.shape
    L = len(params["layers"])
    h = [init_hidden_state[:, l] for l in range(L)]
    outs, rnn_outs = [], []
    for t in range(T):
        x = inputs[:, t]
        for l, lp in enumerate(params["layers"]):
            r = jax.nn.sigmoid(x @ lp["w_ir"] + h[l] @ lp["w_hr"] + lp["b_r"])
            z = jax.nn.sigmoid(x @ lp["w_iz"] + h[l] @ lp["w_hz"] + lp["b_z"])
            n = jnp.tanh(x @ lp["w_in"] + lp["b_in"]
                         + r * (h[l] @ lp["w_hn"] + lp["b_hn"]))
            h[l] = (1.0 - z) * n + z * h[l]
            x = h[l]
        rnn_outs.append(x)
        outs.append(x @ params["w_out"] + params["b_out"])
    outputs = jnp.stack(outs, axis=1)
    rnn_outputs = jnp.stack(rnn_outs, axis=1)
    next_hidden = jnp.stack(h, axis=1)
    return outputs, next_hidden, rnn_outputs


def init_params(key, D, H, L):
    """Deterministic parameter init mirroring the module's shapes:
    weight_ih ~ xavier-uniform, weight_hh ~ orthogonal, biases ~ U(-1/sqrt(H), 1/sqrt(H)).
    Stored transposed as (in_dim, out_dim); b_ir/b_hr and b_iz/b_hz are merged exactly."""
    layers = []
    in_dim = D
    for _ in range(L):
        key, k0, k1, k2, k3, k4, k5, k6 = jax.random.split(key, 8)
        lp = {}
        bound_i = (6.0 / (3 * H + in_dim)) ** 0.5
        for name, k in zip(("w_ir", "w_iz", "w_in"), (k0, k1, k2)):
            lp[name] = jax.random.uniform(k, (in_dim, H), jnp.float32, -bound_i, bound_i)
        for name, k in zip(("w_hr", "w_hz", "w_hn"), (k3, k4, k5)):
            q, _ = jnp.linalg.qr(jax.random.normal(k, (H, H), jnp.float32))
            lp[name] = q
        bb = 1.0 / (H ** 0.5)
        b6 = jax.random.uniform(k6, (6, H), jnp.float32, -bb, bb)
        b_ir, b_iz, b_in_, b_hr, b_hz, b_hn = (b6[i:i + 1] for i in range(6))
        lp["b_r"] = b_ir + b_hr
        lp["b_z"] = b_iz + b_hz
        lp["b_in"] = b_in_
        lp["b_hn"] = b_hn
        layers.append(lp)
        in_dim = H
    key, ko, kb = jax.random.split(key, 3)
    bound_o = (6.0 / (H + D)) ** 0.5
    w_out = jax.random.uniform(ko, (H, D), jnp.float32, -bound_o, bound_o)
    b_out = jax.random.uniform(kb, (1, D), jnp.float32, -1.0 / H ** 0.5, 1.0 / H ** 0.5)
    return {"layers": layers, "w_out": w_out, "b_out": b_out}


if __name__ == "__main__":
    K, T, D, H, L = 2, 8, 8, 32, 2   # batch, seq, rnn_state_dim, hidden, layers

    key = jax.random.PRNGKey(0)
    key, kx, kh, kp = jax.random.split(key, 4)
    inputs = jax.random.normal(kx, (K, T, D), jnp.float32)
    init_hidden = jax.random.normal(kh, (K, L, H), jnp.float32)
    params = init_params(kp, D, H, L)

    outputs, next_hidden, rnn_outputs = rnn_forward(inputs, init_hidden, params)
    jax.block_until_ready((outputs, next_hidden, rnn_outputs))

    # Sanity check against a pure-JAX reference of the same math.
    ref_out, ref_h, ref_rnn = rnn_forward_ref(inputs, init_hidden, params)
    assert outputs.shape == (K, T, D)
    assert next_hidden.shape == (K, L, H)
    assert rnn_outputs.shape == (K, T, H)
    assert jnp.allclose(outputs, ref_out, atol=1e-2, rtol=1e-2)
    assert jnp.allclose(next_hidden, ref_h, atol=1e-2, rtol=1e-2)
    assert jnp.allclose(rnn_outputs, ref_rnn, atol=1e-2, rtol=1e-2)

    print("KERNEL_OK")
</pallas_src>

<mosaic_0001>
module attributes {stable_mosaic.version = 11 : i64} {
  func.func @kernel(%arg0: i32, %arg1: memref<16x8xf32, #tpu.memory_space<vmem>>, %arg2: memref<2x2x32xf32, #tpu.memory_space<vmem>>, %arg3: memref<8x96xf32, #tpu.memory_space<vmem>>, %arg4: memref<1x96xf32, #tpu.memory_space<vmem>>, %arg5: memref<2x32x96xf32, #tpu.memory_space<vmem>>, %arg6: memref<1x32x96xf32, #tpu.memory_space<vmem>>, %arg7: memref<1x1x96xf32, #tpu.memory_space<vmem>>, %arg8: memref<2x1x32xf32, #tpu.memory_space<vmem>>, %arg9: memref<32x8xf32, #tpu.memory_space<vmem>>, %arg10: memref<1x8xf32, #tpu.memory_space<vmem>>, %arg11: memref<16x8xf32, #tpu.memory_space<vmem>>, %arg12: memref<16x32xf32, #tpu.memory_space<vmem>>, %arg13: memref<2x2x32xf32, #tpu.memory_space<vmem>>, %arg14: memref<16x96xf32, #tpu.memory_space<vmem>>) attributes {dimension_semantics = [#tpu.dimension_semantics<arbitrary>], iteration_bounds = array<i64: 1>, scalar_prefetch = 0 : i64, scratch_operands = 1 : i64, tpu.core_type = #tpu.core_type<tc>, window_params = [{pipeline_mode = #tpu.pipeline_mode<synchronous>, transform_indices = @transform_0, window_bounds = array<i64: 16, 8>}, {pipeline_mode = #tpu.pipeline_mode<synchronous>, transform_indices = @transform_1, window_bounds = array<i64: 2, 2, 32>}, {pipeline_mode = #tpu.pipeline_mode<synchronous>, transform_indices = @transform_2, window_bounds = array<i64: 8, 96>}, {pipeline_mode = #tpu.pipeline_mode<synchronous>, transform_indices = @transform_3, window_bounds = array<i64: 1, 96>}, {pipeline_mode = #tpu.pipeline_mode<synchronous>, transform_indices = @transform_4, window_bounds = array<i64: 2, 32, 96>}, {pipeline_mode = #tpu.pipeline_mode<synchronous>, transform_indices = @transform_5, window_bounds = array<i64: 1, 32, 96>}, {pipeline_mode = #tpu.pipeline_mode<synchronous>, transform_indices = @transform_6, window_bounds = array<i64: 1, 1, 96>}, {pipeline_mode = #tpu.pipeline_mode<synchronous>, transform_indices = @transform_7, window_bounds = array<i64: 2, 1, 32>}, {pipeline_mode = #tpu.pipeline_mode<synchronous>, transform_indices = @transform_8, window_bounds = array<i64: 32, 8>}, {pipeline_mode = #tpu.pipeline_mode<synchronous>, transform_indices = @transform_9, window_bounds = array<i64: 1, 8>}, {pipeline_mode = #tpu.pipeline_mode<synchronous>, transform_indices = @transform_10, window_bounds = array<i64: 16, 8>}, {pipeline_mode = #tpu.pipeline_mode<synchronous>, transform_indices = @transform_11, window_bounds = array<i64: 16, 32>}, {pipeline_mode = #tpu.pipeline_mode<synchronous>, transform_indices = @transform_12, window_bounds = array<i64: 2, 2, 32>}]} {
    %c0 = arith.constant 0 : index
    %c0_0 = arith.constant 0 : index
    %0 = vector.load %arg1[%c0, %c0_0] : memref<16x8xf32, #tpu.memory_space<vmem>>, vector<16x8xf32>
    %c0_1 = arith.constant 0 : index
    %c0_2 = arith.constant 0 : index
    %1 = vector.load %arg3[%c0_1, %c0_2] : memref<8x96xf32, #tpu.memory_space<vmem>>, vector<8x96xf32>
    %cst = arith.constant dense<0.000000e+00> : vector<16x96xf32>
    %2 = tpu.matmul %0, %1, %cst {dimension_numbers = #tpu.dot_dimension_numbers<[1], [0], [0], [1], [0, 0, 1, 1], [], []>} : vector<16x8xf32>, vector<8x96xf32>, vector<16x96xf32> -> vector<16x96xf32>
    %c0_3 = arith.constant 0 : index
    %c0_4 = arith.constant 0 : index
    %3 = vector.load %arg4[%c0_3, %c0_4] : memref<1x96xf32, #tpu.memory_space<vmem>>, vector<1x96xf32>
    %4 = vector.broadcast %3 : vector<1x96xf32> to vector<16x96xf32>
    %5 = arith.addf %2, %4 : vector<16x96xf32>
    %c0_5 = arith.constant 0 : index
    %c0_6 = arith.constant 0 : index
    %6 = vector.load %arg14[%c0_5, %c0_6] : memref<16x96xf32, #tpu.memory_space<vmem>>, vector<16x96xf32>
    tpu.vector_store %arg14[%c0_5, %c0_6], %5 {strides = array<i32>} : memref<16x96xf32, #tpu.memory_space<vmem>>, vector<16x96xf32>,
    %c0_7 = arith.constant 0 : index
    %c0_8 = arith.constant 0 : index
    %c0_9 = arith.constant 0 : index
    %7 = vector.load %arg5[%c0_7, %c0_8, %c0_9] : memref<2x32x96xf32, #tpu.memory_space<vmem>>, vector<1x32x96xf32>
    %8 = vector.shape_cast %7 : vector<1x32x96xf32> to vector<32x96xf32>
    %c1 = arith.constant 1 : index
    %c0_10 = arith.constant 0 : index
    %c0_11 = arith.constant 0 : index
    %9 = vector.load %arg5[%c1, %c0_10, %c0_11] : memref<2x32x96xf32, #tpu.memory_space<vmem>>, vector<1x32x96xf32>
    %10 = vector.shape_cast %9 : vector<1x32x96xf32> to vector<32x96xf32>
    %c0_12 = arith.constant 0 : index
    %c0_13 = arith.constant 0 : index
    %c0_14 = arith.constant 0 : index
    %11 = vector.load %arg8[%c0_12, %c0_13, %c0_14] : memref<2x1x32xf32, #tpu.memory_space<vmem>>, vector<1x1x32xf32>
    %12 = vector.shape_cast %11 : vector<1x1x32xf32> to vector<1x32xf32>
    %c1_15 = arith.constant 1 : index
    %c0_16 = arith.constant 0 : index
    %c0_17 = arith.constant 0 : index
    %13 = vector.load %arg8[%c1_15, %c0_16, %c0_17] : memref<2x1x32xf32, #tpu.memory_space<vmem>>, vector<1x1x32xf32>
    %14 = vector.shape_cast %13 : vector<1x1x32xf32> to vector<1x32xf32>
    %c0_18 = arith.constant 0 : index
    %c0_19 = arith.constant 0 : index
    %c0_20 = arith.constant 0 : index
    %15 = vector.load %arg6[%c0_18, %c0_19, %c0_20] : memref<1x32x96xf32, #tpu.memory_space<vmem>>, vector<1x32x96xf32>
    %16 = vector.shape_cast %15 : vector<1x32x96xf32> to vector<32x96xf32>
    %c0_21 = arith.constant 0 : index
    %c0_22 = arith.constant 0 : index
    %c0_23 = arith.constant 0 : index
    %17 = vector.load %arg7[%c0_21, %c0_22, %c0_23] : memref<1x1x96xf32, #tpu.memory_space<vmem>>, vector<1x1x96xf32>
    %18 = vector.shape_cast %17 : vector<1x1x96xf32> to vector<1x96xf32>
    %c0_24 = arith.constant 0 : index
    %c0_25 = arith.constant 0 : index
    %c0_26 = arith.constant 0 : index
    %19 = vector.load %arg2[%c0_24, %c0_25, %c0_26] : memref<2x2x32xf32, #tpu.memory_space<vmem>>, vector<1x2x32xf32>
    %20 = vector.shape_cast %19 : vector<1x2x32xf32> to vector<2x32xf32>
    %c1_27 = arith.constant 1 : index
    %c0_28 = arith.constant 0 : index
    %c0_29 = arith.constant 0 : index
    %21 = vector.load %arg2[%c1_27, %c0_28, %c0_29] : memref<2x2x32xf32, #tpu.memory_space<vmem>>, vector<1x2x32xf32>
    %22 = vector.shape_cast %21 : vector<1x2x32xf32> to vector<2x32xf32>
    %c0_30 = arith.constant 0 : index
    %c0_31 = arith.constant 0 : index
    %23 = vector.load %arg14[%c0_30, %c0_31] : memref<16x96xf32, #tpu.memory_space<vmem>>, vector<2x96xf32>
    %cst_32 = arith.constant dense<0.000000e+00> : vector<2x96xf32>
    %24 = tpu.matmul %20, %8, %cst_32 {dimension_numbers = #tpu.dot_dimension_numbers<[1], [0], [0], [1], [0, 0, 1, 1], [], []>} : vector<2x32xf32>, vector<32x96xf32>, vector<2x96xf32> -> vector<2x96xf32>
    %25 = vector.extract_strided_slice %23 {offsets = [0, 0], sizes = [2, 64], strides = [1, 1]} : vector<2x96xf32> to vector<2x64xf32>
    %26 = vector.extract_strided_slice %24 {offsets = [0, 0], sizes = [2, 64], strides = [1, 1]} : vector<2x96xf32> to vector<2x64xf32>
    %27 = arith.addf %25, %26 : vector<2x64xf32>
    %28 = arith.negf %27 : vector<2x64xf32>
    %29 = math.exp %28 : vector<2x64xf32>
    %cst_33 = arith.constant 1.000000e+00 : f32
    %30 = vector.broadcast %cst_33 : f32 to vector<2x64xf32>
    %31 = arith.addf %30, %29 : vector<2x64xf32>
    %32 = arith.divf %30, %31 : vector<2x64xf32>
    %33 = vector.extract_strided_slice %32 {offsets = [0, 0], sizes = [2, 32], strides = [1, 1]} : vector<2x64xf32> to vector<2x32xf32>
    %34 = vector.extract_strided_slice %32 {offsets = [0, 32], sizes = [2, 32], strides = [1, 1]} : vector<2x64xf32> to vector<2x32xf32>
    %35 = vector.extract_strided_slice %23 {offsets = [0, 64], sizes = [2, 32], strides = [1, 1]} : vector<2x96xf32> to vector<2x32xf32>
    %36 = vector.extract_strided_slice %24 {offsets = [0, 64], sizes = [2, 32], strides = [1, 1]} : vector<2x96xf32> to vector<2x32xf32>
    %37 = vector.broadcast %12 : vector<1x32xf32> to vector<2x32xf32>
    %38 = arith.addf %36, %37 : vector<2x32xf32>
    %39 = arith.mulf %33, %38 : vector<2x32xf32>
    %40 = arith.addf %35, %39 : vector<2x32xf32>
    %41 = math.tanh %40 : vector<2x32xf32>
    %42 = arith.subf %20, %41 : vector<2x32xf32>
    %43 = arith.mulf %34, %42 : vector<2x32xf32>
    %44 = arith.addf %41, %43 : vector<2x32xf32>
    %cst_34 = arith.constant dense<0.000000e+00> : vector<2x96xf32>
    %45 = tpu.matmul %44, %16, %cst_34 {dimension_numbers = #tpu.dot_dimension_numbers<[1], [0], [0], [1], [0, 0, 1, 1], [], []>} : vector<2x32xf32>, vector<32x96xf32>, vector<2x96xf32> -> vector<2x96xf32>
    %46 = vector.broadcast %18 : vector<1x96xf32> to vector<2x96xf32>
    %47 = arith.addf %45, %46 : vector<2x96xf32>
    %cst_35 = arith.constant dense<0.000000e+00> : vector<2x96xf32>
    %48 = tpu.matmul %22, %10, %cst_35 {dimension_numbers = #tpu.dot_dimension_numbers<[1], [0], [0], [1], [0, 0, 1, 1], [], []>} : vector<2x32xf32>, vector<32x96xf32>, vector<2x96xf32> -> vector<2x96xf32>
    %49 = vector.extract_strided_slice %47 {offsets = [0, 0], sizes = [2, 64], strides = [1, 1]} : vector<2x96xf32> to vector<2x64xf32>
    %50 = vector.extract_strided_slice %48 {offsets = [0, 0], sizes = [2, 64], strides = [1, 1]} : vector<2x96xf32> to vector<2x64xf32>
    %51 = arith.addf %49, %50 : vector<2x64xf32>
    %52 = arith.negf %51 : vector<2x64xf32>
    %53 = math.exp %52 : vector<2x64xf32>
    %cst_36 = arith.constant 1.000000e+00 : f32
    %54 = vector.broadcast %cst_36 : f32 to vector<2x64xf32>
    %55 = arith.addf %54, %53 : vector<2x64xf32>
    %56 = arith.divf %54, %55 : vector<2x64xf32>
    %57 = vector.extract_strided_slice %56 {offsets = [0, 0], sizes = [2, 32], strides = [1, 1]} : vector<2x64xf32> to vector<2x32xf32>
    %58 = vector.extract_strided_slice %56 {offsets = [0, 32], sizes = [2, 32], strides = [1, 1]} : vector<2x64xf32> to vector<2x32xf32>
    %59 = vector.extract_strided_slice %47 {offsets = [0, 64], sizes = [2, 32], strides = [1, 1]} : vector<2x96xf32> to vector<2x32xf32>
    %60 = vector.extract_strided_slice %48 {offsets = [0, 64], sizes = [2, 32], strides = [1, 1]} : vector<2x96xf32> to vector<2x32xf32>
    %61 = vector.broadcast %14 : vector<1x32xf32> to vector<2x32xf32>
    %62 = arith.addf %60, %61 : vector<2x32xf32>
    %63 = arith.mulf %57, %62 : vector<2x32xf32>
    %64 = arith.addf %59, %63 : vector<2x32xf32>
    %65 = math.tanh %64 : vector<2x32xf32>
    %66 = arith.subf %22, %65 : vector<2x32xf32>
    %67 = arith.mulf %58, %66 : vector<2x32xf32>
    %68 = arith.addf %65, %67 : vector<2x32xf32>
    %c0_37 = arith.constant 0 : index
    %c0_38 = arith.constant 0 : index
    %69 = vector.load %arg12[%c0_37, %c0_38] : memref<16x32xf32, #tpu.memory_space<vmem>>, vector<2x32xf32>
    tpu.vector_store %arg12[%c0_37, %c0_38], %68 {strides = array<i32>} : memref<16x32xf32, #tpu.memory_space<vmem>>, vector<2x32xf32>,
    %c2 = arith.constant 2 : index
    %c0_39 = arith.constant 0 : index
    %70 = vector.load %arg14[%c2, %c0_39] : memref<16x96xf32, #tpu.memory_space<vmem>>, vector<2x96xf32>
    %cst_40 = arith.constant dense<0.000000e+00> : vector<2x96xf32>
    %71 = tpu.matmul %44, %8, %cst_40 {dimension_numbers = #tpu.dot_dimension_numbers<[1], [0], [0], [1], [0, 0, 1, 1], [], []>} : vector<2x32xf32>, vector<32x96xf32>, vector<2x96xf32> -> vector<2x96xf32>
    %72 = vector.extract_strided_slice %70 {offsets = [0, 0], sizes = [2, 64], strides = [1, 1]} : vector<2x96xf32> to vector<2x64xf32>
    %73 = vector.extract_strided_slice %71 {offsets = [0, 0], sizes = [2, 64], strides = [1, 1]} : vector<2x96xf32> to vector<2x64xf32>
    %74 = arith.addf %72, %73 : vector<2x64xf32>
    %75 = arith.negf %74 : vector<2x64xf32>
    %76 = math.exp %75 : vector<2x64xf32>
    %cst_41 = arith.constant 1.000000e+00 : f32
    %77 = vector.broadcast %cst_41 : f32 to vector<2x64xf32>
    %78 = arith.addf %77, %76 : vector<2x64xf32>
    %79 = arith.divf %77, %78 : vector<2x64xf32>
    %80 = vector.extract_strided_slice %79 {offsets = [0, 0], sizes = [2, 32], strides = [1, 1]} : vector<2x64xf32> to vector<2x32xf32>
    %81 = vector.extract_strided_slice %79 {offsets = [0, 32], sizes = [2, 32], strides = [1, 1]} : vector<2x64xf32> to vector<2x32xf32>
    %82 = vector.extract_strided_slice %70 {offsets = [0, 64], sizes = [2, 32], strides = [1, 1]} : vector<2x96xf32> to vector<2x32xf32>
    %83 = vector.extract_strided_slice %71 {offsets = [0, 64], sizes = [2, 32], strides = [1, 1]} : vector<2x96xf32> to vector<2x32xf32>
    %84 = vector.broadcast %12 : vector<1x32xf32> to vector<2x32xf32>
    %85 = arith.addf %83, %84 : vector<2x32xf32>
    %86 = arith.mulf %80, %85 : vector<2x32xf32>
    %87 = arith.addf %82, %86 : vector<2x32xf32>
    %88 = math.tanh %87 : vector<2x32xf32>
    %89 = arith.subf %44, %88 : vector<2x32xf32>
    %90 = arith.mulf %81, %89 : vector<2x32xf32>
    %91 = arith.addf %88, %90 : vector<2x32xf32>
    %cst_42 = arith.constant dense<0.000000e+00> : vector<2x96xf32>
    %92 = tpu.matmul %91, %16, %cst_42 {dimension_numbers = #tpu.dot_dimension_numbers<[1], [0], [0], [1], [0, 0, 1, 1], [], []>} : vector<2x32xf32>, vector<32x96xf32>, vector<2x96xf32> -> vector<2x96xf32>
    %93 = vector.broadcast %18 : vector<1x96xf32> to vector<2x96xf32>
    %94 = arith.addf %92, %93 : vector<2x96xf32>
    %cst_43 = arith.constant dense<0.000000e+00> : vector<2x96xf32>
    %95 = tpu.matmul %68, %10, %cst_43 {dimension_numbers = #tpu.dot_dimension_numbers<[1], [0], [0], [1], [0, 0, 1, 1], [], []>} : vector<2x32xf32>, vector<32x96xf32>, vector<2x96xf32> -> vector<2x96xf32>
    %96 = vector.extract_strided_slice %94 {offsets = [0, 0], sizes = [2, 64], strides = [1, 1]} : vector<2x96xf32> to vector<2x64xf32>
    %97 = vector.extract_strided_slice %95 {offsets = [0, 0], sizes = [2, 64], strides = [1, 1]} : vector<2x96xf32> to vector<2x64xf32>
    %98 = arith.addf %96, %97 : vector<2x64xf32>
    %99 = arith.negf %98 : vector<2x64xf32>
    %100 = math.exp %99 : vector<2x64xf32>
    %cst_44 = arith.constant 1.000000e+00 : f32
    %101 = vector.broadcast %cst_44 : f32 to vector<2x64xf32>
    %102 = arith.addf %101, %100 : vector<2x64xf32>
    %103 = arith.divf %101, %102 : vector<2x64xf32>
    %104 = vector.extract_strided_slice %103 {offsets = [0, 0], sizes = [2, 32], strides = [1, 1]} : vector<2x64xf32> to vector<2x32xf32>
    %105 = vector.extract_strided_slice %103 {offsets = [0, 32], sizes = [2, 32], strides = [1, 1]} : vector<2x64xf32> to vector<2x32xf32>
    %106 = vector.extract_strided_slice %94 {offsets = [0, 64], sizes = [2, 32], strides = [1, 1]} : vector<2x96xf32> to vector<2x32xf32>
    %107 = vector.extract_strided_slice %95 {offsets = [0, 64], sizes = [2, 32], strides = [1, 1]} : vector<2x96xf32> to vector<2x32xf32>
    %108 = vector.broadcast %14 : vector<1x32xf32> to vector<2x32xf32>
    %109 = arith.addf %107, %108 : vector<2x32xf32>
    %110 = arith.mulf %104, %109 : vector<2x32xf32>
    %111 = arith.addf %106, %110 : vector<2x32xf32>
    %112 = math.tanh %111 : vector<2x32xf32>
    %113 = arith.subf %68, %112 : vector<2x32xf32>
    %114 = arith.mulf %105, %113 : vector<2x32xf32>
    %115 = arith.addf %112, %114 : vector<2x32xf32>
    %c2_45 = arith.constant 2 : index
    %c0_46 = arith.constant 0 : index
    %116 = vector.load %arg12[%c2_45, %c0_46] : memref<16x32xf32, #tpu.memory_space<vmem>>, vector<2x32xf32>
    tpu.vector_store %arg12[%c2_45, %c0_46], %115 {strides = array<i32>} : memref<16x32xf32, #tpu.memory_space<vmem>>, vector<2x32xf32>,
    %c4 = arith.constant 4 : index
    %c0_47 = arith.constant 0 : index
    %117 = vector.load %arg14[%c4, %c0_47] : memref<16x96xf32, #tpu.memory_space<vmem>>, vector<2x96xf32>
    %cst_48 = arith.constant dense<0.000000e+00> : vector<2x96xf32>
    %118 = tpu.matmul %91, %8, %cst_48 {dimension_numbers = #tpu.dot_dimension_numbers<[1], [0], [0], [1], [0, 0, 1, 1], [], []>} : vector<2x32xf32>, vector<32x96xf32>, vector<2x96xf32> -> vector<2x96xf32>
    %119 = vector.extract_strided_slice %117 {offsets = [0, 0], sizes = [2, 64], strides = [1, 1]} : vector<2x96xf32> to vector<2x64xf32>
    %120 = vector.extract_strided_slice %118 {offsets = [0, 0], sizes = [2, 64], strides = [1, 1]} : vector<2x96xf32> to vector<2x64xf32>
    %121 = arith.addf %119, %120 : vector<2x64xf32>
    %122 = arith.negf %121 : vector<2x64xf32>
    %123 = math.exp %122 : vector<2x64xf32>
    %cst_49 = arith.constant 1.000000e+00 : f32
    %124 = vector.broadcast %cst_49 : f32 to vector<2x64xf32>
    %125 = arith.addf %124, %123 : vector<2x64xf32>
    %126 = arith.divf %124, %125 : vector<2x64xf32>
    %127 = vector.extract_strided_slice %126 {offsets = [0, 0], sizes = [2, 32], strides = [1, 1]} : vector<2x64xf32> to vector<2x32xf32>
    %128 = vector.extract_strided_slice %126 {offsets = [0, 32], sizes = [2, 32], strides = [1, 1]} : vector<2x64xf32> to vector<2x32xf32>
    %129 = vector.extract_strided_slice %117 {offsets = [0, 64], sizes = [2, 32], strides = [1, 1]} : vector<2x96xf32> to vector<2x32xf32>
    %130 = vector.extract_strided_slice %118 {offsets = [0, 64], sizes = [2, 32], strides = [1, 1]} : vector<2x96xf32> to vector<2x32xf32>
    %131 = vector.broadcast %12 : vector<1x32xf32> to vector<2x32xf32>
    %132 = arith.addf %130, %131 : vector<2x32xf32>
    %133 = arith.mulf %127, %132 : vector<2x32xf32>
    %134 = arith.addf %129, %133 : vector<2x32xf32>
    %135 = math.tanh %134 : vector<2x32xf32>
    %136 = arith.subf %91, %135 : vector<2x32xf32>
    %137 = arith.mulf %128, %136 : vector<2x32xf32>
    %138 = arith.addf %135, %137 : vector<2x32xf32>
    %cst_50 = arith.constant dense<0.000000e+00> : vector<2x96xf32>
    %139 = tpu.matmul %138, %16, %cst_50 {dimension_numbers = #tpu.dot_dimension_numbers<[1], [0], [0], [1], [0, 0, 1, 1], [], []>} : vector<2x32xf32>, vector<32x96xf32>, vector<2x96xf32> -> vector<2x96xf32>
    %140 = vector.broadcast %18 : vector<1x96xf32> to vector<2x96xf32>
    %141 = arith.addf %139, %140 : vector<2x96xf32>
    %cst_51 = arith.constant dense<0.000000e+00> : vector<2x96xf32>
    %142 = tpu.matmul %115, %10, %cst_51 {dimension_numbers = #tpu.dot_dimension_numbers<[1], [0], [0], [1], [0, 0, 1, 1], [], []>} : vector<2x32xf32>, vector<32x96xf32>, vector<2x96xf32> -> vector<2x96xf32>
    %143 = vector.extract_strided_slice %141 {offsets = [0, 0], sizes = [2, 64], strides = [1, 1]} : vector<2x96xf32> to vector<2x64xf32>
    %144 = vector.extract_strided_slice %142 {offsets = [0, 0], sizes = [2, 64], strides = [1, 1]} : vector<2x96xf32> to vector<2x64xf32>
    %145 = arith.addf %143, %144 : vector<2x64xf32>
    %146 = arith.negf %145 : vector<2x64xf32>
    %147 = math.exp %146 : vector<2x64xf32>
    %cst_52 = arith.constant 1.000000e+00 : f32
    %148 = vector.broadcast %cst_52 : f32 to vector<2x64xf32>
    %149 = arith.addf %148, %147 : vector<2x64xf32>
    %150 = arith.divf %148, %149 : vector<2x64xf32>
    %151 = vector.extract_strided_slice %150 {offsets = [0, 0], sizes = [2, 32], strides = [1, 1]} : vector<2x64xf32> to vector<2x32xf32>
    %152 = vector.extract_strided_slice %150 {offsets = [0, 32], sizes = [2, 32], strides = [1, 1]} : vector<2x64xf32> to vector<2x32xf32>
    %153 = vector.extract_strided_slice %141 {offsets = [0, 64], sizes = [2, 32], strides = [1, 1]} : vector<2x96xf32> to vector<2x32xf32>
    %154 = vector.extract_strided_slice %142 {offsets = [0, 64], sizes = [2, 32], strides = [1, 1]} : vector<2x96xf32> to vector<2x32xf32>
    %155 = vector.broadcast %14 : vector<1x32xf32> to vector<2x32xf32>
    %156 = arith.addf %154, %155 : vector<2x32xf32>
    %157 = arith.mulf %151, %156 : vector<2x32xf32>
    %158 = arith.addf %153, %157 : vector<2x32xf32>
    %159 = math.tanh %158 : vector<2x32xf32>
    %160 = arith.subf %115, %159 : vector<2x32xf32>
    %161 = arith.mulf %152, %160 : vector<2x32xf32>
    %162 = arith.addf %159, %161 : vector<2x32xf32>
    %c4_53 = arith.constant 4 : index
    %c0_54 = arith.constant 0 : index
    %163 = vector.load %arg12[%c4_53, %c0_54] : memref<16x32xf32, #tpu.memory_space<vmem>>, vector<2x32xf32>
    tpu.vector_store %arg12[%c4_53, %c0_54], %162 {strides = array<i32>} : memref<16x32xf32, #tpu.memory_space<vmem>>, vector<2x32xf32>,
    %c6 = arith.constant 6 : index
    %c0_55 = arith.constant 0 : index
    %164 = vector.load %arg14[%c6, %c0_55] : memref<16x96xf32, #tpu.memory_space<vmem>>, vector<2x96xf32>
    %cst_56 = arith.constant dense<0.000000e+00> : vector<2x96xf32>
    %165 = tpu.matmul %138, %8, %cst_56 {dimension_numbers = #tpu.dot_dimension_numbers<[1], [0], [0], [1], [0, 0, 1, 1], [], []>} : vector<2x32xf32>, vector<32x96xf32>, vector<2x96xf32> -> vector<2x96xf32>
    %166 = vector.extract_strided_slice %164 {offsets = [0, 0], sizes = [2, 64], strides = [1, 1]} : vector<2x96xf32> to vector<2x64xf32>
    %167 = vector.extract_strided_slice %165 {offsets = [0, 0], sizes = [2, 64], strides = [1, 1]} : vector<2x96xf32> to vector<2x64xf32>
    %168 = arith.addf %166, %167 : vector<2x64xf32>
    %169 = arith.negf %168 : vector<2x64xf32>
    %170 = math.exp %169 : vector<2x64xf32>
    %cst_57 = arith.constant 1.000000e+00 : f32
    %171 = vector.broadcast %cst_57 : f32 to vector<2x64xf32>
    %172 = arith.addf %171, %170 : vector<2x64xf32>
    %173 = arith.divf %171, %172 : vector<2x64xf32>
    %174 = vector.extract_strided_slice %173 {offsets = [0, 0], sizes = [2, 32], strides = [1, 1]} : vector<2x64xf32> to vector<2x32xf32>
    %175 = vector.extract_strided_slice %173 {offsets = [0, 32], sizes = [2, 32], strides = [1, 1]} : vector<2x64xf32> to vector<2x32xf32>
    %176 = vector.extract_strided_slice %164 {offsets = [0, 64], sizes = [2, 32], strides = [1, 1]} : vector<2x96xf32> to vector<2x32xf32>
    %177 = vector.extract_strided_slice %165 {offsets = [0, 64], sizes = [2, 32], strides = [1, 1]} : vector<2x96xf32> to vector<2x32xf32>
    %178 = vector.broadcast %12 : vector<1x32xf32> to vector<2x32xf32>
    %179 = arith.addf %177, %178 : vector<2x32xf32>
    %180 = arith.mulf %174, %179 : vector<2x32xf32>
    %181 = arith.addf %176, %180 : vector<2x32xf32>
    %182 = math.tanh %181 : vector<2x32xf32>
    %183 = arith.subf %138, %182 : vector<2x32xf32>
    %184 = arith.mulf %175, %183 : vector<2x32xf32>
    %185 = arith.addf %182, %184 : vector<2x32xf32>
    %cst_58 = arith.constant dense<0.000000e+00> : vector<2x96xf32>
    %186 = tpu.matmul %185, %16, %cst_58 {dimension_numbers = #tpu.dot_dimension_numbers<[1], [0], [0], [1], [0, 0, 1, 1], [], []>} : vector<2x32xf32>, vector<32x96xf32>, vector<2x96xf32> -> vector<2x96xf32>
    %187 = vector.broadcast %18 : vector<1x96xf32> to vector<2x96xf32>
    %188 = arith.addf %186, %187 : vector<2x96xf32>
    %cst_59 = arith.constant dense<0.000000e+00> : vector<2x96xf32>
    %189 = tpu.matmul %162, %10, %cst_59 {dimension_numbers = #tpu.dot_dimension_numbers<[1], [0], [0], [1], [0, 0, 1, 1], [], []>} : vector<2x32xf32>, vector<32x96xf32>, vector<2x96xf32> -> vector<2x96xf32>
    %190 = vector.extract_strided_slice %188 {offsets = [0, 0], sizes = [2, 64], strides = [1, 1]} : vector<2x96xf32> to vector<2x64xf32>
    %191 = vector.extract_strided_slice %189 {offsets = [0, 0], sizes = [2, 64], strides = [1, 1]} : vector<2x96xf32> to vector<2x64xf32>
    %192 = arith.addf %190, %191 : vector<2x64xf32>
    %193 = arith.negf %192 : vector<2x64xf32>
    %194 = math.exp %193 : vector<2x64xf32>
    %cst_60 = arith.constant 1.000000e+00 : f32
    %195 = vector.broadcast %cst_60 : f32 to vector<2x64xf32>
    %196 = arith.addf %195, %194 : vector<2x64xf32>
    %197 = arith.divf %195, %196 : vector<2x64xf32>
    %198 = vector.extract_strided_slice %197 {offsets = [0, 0], sizes = [2, 32], strides = [1, 1]} : vector<2x64xf32> to vector<2x32xf32>
    %199 = vector.extract_strided_slice %197 {offsets = [0, 32], sizes = [2, 32], strides = [1, 1]} : vector<2x64xf32> to vector<2x32xf32>
    %200 = vector.extract_strided_slice %188 {offsets = [0, 64], sizes = [2, 32], strides = [1, 1]} : vector<2x96xf32> to vector<2x32xf32>
    %201 = vector.extract_strided_slice %189 {offsets = [0, 64], sizes = [2, 32], strides = [1, 1]} : vector<2x96xf32> to vector<2x32xf32>
    %202 = vector.broadcast %14 : vector<1x32xf32> to vector<2x32xf32>
    %203 = arith.addf %201, %202 : vector<2x32xf32>
    %204 = arith.mulf %198, %203 : vector<2x32xf32>
    %205 = arith.addf %200, %204 : vector<2x32xf32>
    %206 = math.tanh %205 : vector<2x32xf32>
    %207 = arith.subf %162, %206 : vector<2x32xf32>
    %208 = arith.mulf %199, %207 : vector<2x32xf32>
    %209 = arith.addf %206, %208 : vector<2x32xf32>
    %c6_61 = arith.constant 6 : index
    %c0_62 = arith.constant 0 : index
    %210 = vector.load %arg12[%c6_61, %c0_62] : memref<16x32xf32, #tpu.memory_space<vmem>>, vector<2x32xf32>
    tpu.vector_store %arg12[%c6_61, %c0_62], %209 {strides = array<i32>} : memref<16x32xf32, #tpu.memory_space<vmem>>, vector<2x32xf32>,
    %c8 = arith.constant 8 : index
    %c0_63 = arith.constant 0 : index
    %211 = vector.load %arg14[%c8, %c0_63] : memref<16x96xf32, #tpu.memory_space<vmem>>, vector<2x96xf32>
    %cst_64 = arith.constant dense<0.000000e+00> : vector<2x96xf32>
    %212 = tpu.matmul %185, %8, %cst_64 {dimension_numbers = #tpu.dot_dimension_numbers<[1], [0], [0], [1], [0, 0, 1, 1], [], []>} : vector<2x32xf32>, vector<32x96xf32>, vector<2x96xf32> -> vector<2x96xf32>
    %213 = vector.extract_strided_slice %211 {offsets = [0, 0], sizes = [2, 64], strides = [1, 1]} : vector<2x96xf32> to vector<2x64xf32>
    %214 = vector.extract_strided_slice %212 {offsets = [0, 0], sizes = [2, 64], strides = [1, 1]} : vector<2x96xf32> to vector<2x64xf32>
    %215 = arith.addf %213, %214 : vector<2x64xf32>
    %216 = arith.negf %215 : vector<2x64xf32>
    %217 = math.exp %216 : vector<2x64xf32>
    %cst_65 = arith.constant 1.000000e+00 : f32
    %218 = vector.broadcast %cst_65 : f32 to vector<2x64xf32>
    %219 = arith.addf %218, %217 : vector<2x64xf32>
    %220 = arith.divf %218, %219 : vector<2x64xf32>
    %221 = vector.extract_strided_slice %220 {offsets = [0, 0], sizes = [2, 32], strides = [1, 1]} : vector<2x64xf32> to vector<2x32xf32>
    %222 = vector.extract_strided_slice %220 {offsets = [0, 32], sizes = [2, 32], strides = [1, 1]} : vector<2x64xf32> to vector<2x32xf32>
    %223 = vector.extract_strided_slice %211 {offsets = [0, 64], sizes = [2, 32], strides = [1, 1]} : vector<2x96xf32> to vector<2x32xf32>
    %224 = vector.extract_strided_slice %212 {offsets = [0, 64], sizes = [2, 32], strides = [1, 1]} : vector<2x96xf32> to vector<2x32xf32>
    %225 = vector.broadcast %12 : vector<1x32xf32> to vector<2x32xf32>
    %226 = arith.addf %224, %225 : vector<2x32xf32>
    %227 = arith.mulf %221, %226 : vector<2x32xf32>
    %228 = arith.addf %223, %227 : vector<2x32xf32>
    %229 = math.tanh %228 : vector<2x32xf32>
    %230 = arith.subf %185, %229 : vector<2x32xf32>
    %231 = arith.mulf %222, %230 : vector<2x32xf32>
    %232 = arith.addf %229, %231 : vector<2x32xf32>
    %cst_66 = arith.constant dense<0.000000e+00> : vector<2x96xf32>
    %233 = tpu.matmul %232, %16, %cst_66 {dimension_numbers = #tpu.dot_dimension_numbers<[1], [0], [0], [1], [0, 0, 1, 1], [], []>} : vector<2x32xf32>, vector<32x96xf32>, vector<2x96xf32> -> vector<2x96xf32>
    %234 = vector.broadcast %18 : vector<1x96xf32> to vector<2x96xf32>
    %235 = arith.addf %233, %234 : vector<2x96xf32>
    %cst_67 = arith.constant dense<0.000000e+00> : vector<2x96xf32>
    %236 = tpu.matmul %209, %10, %cst_67 {dimension_numbers = #tpu.dot_dimension_numbers<[1], [0], [0], [1], [0, 0, 1, 1], [], []>} : vector<2x32xf32>, vector<32x96xf32>, vector<2x96xf32> -> vector<2x96xf32>
    %237 = vector.extract_strided_slice %235 {offsets = [0, 0], sizes = [2, 64], strides = [1, 1]} : vector<2x96xf32> to vector<2x64xf32>
    %238 = vector.extract_strided_slice %236 {offsets = [0, 0], sizes = [2, 64], strides = [1, 1]} : vector<2x96xf32> to vector<2x64xf32>
    %239 = arith.addf %237, %238 : vector<2x64xf32>
    %240 = arith.negf %239 : vector<2x64xf32>
    %241 = math.exp %240 : vector<2x64xf32>
    %cst_68 = arith.constant 1.000000e+00 : f32
    %242 = vector.broadcast %cst_68 : f32 to vector<2x64xf32>
    %243 = arith.addf %242, %241 : vector<2x64xf32>
    %244 = arith.divf %242, %243 : vector<2x64xf32>
    %245 = vector.extract_strided_slice %244 {offsets = [0, 0], sizes = [2, 32], strides = [1, 1]} : vector<2x64xf32> to vector<2x32xf32>
    %246 = vector.extract_strided_slice %244 {offsets = [0, 32], sizes = [2, 32], strides = [1, 1]} : vector<2x64xf32> to vector<2x32xf32>
    %247 = vector.extract_strided_slice %235 {offsets = [0, 64], sizes = [2, 32], strides = [1, 1]} : vector<2x96xf32> to vector<2x32xf32>
    %248 = vector.extract_strided_slice %236 {offsets = [0, 64], sizes = [2, 32], strides = [1, 1]} : vector<2x96xf32> to vector<2x32xf32>
    %249 = vector.broadcast %14 : vector<1x32xf32> to vector<2x32xf32>
    %250 = arith.addf %248, %249 : vector<2x32xf32>
    %251 = arith.mulf %245, %250 : vector<2x32xf32>
    %252 = arith.addf %247, %251 : vector<2x32xf32>
    %253 = math.tanh %252 : vector<2x32xf32>
    %254 = arith.subf %209, %253 : vector<2x32xf32>
    %255 = arith.mulf %246, %254 : vector<2x32xf32>
    %256 = arith.addf %253, %255 : vector<2x32xf32>
    %c8_69 = arith.constant 8 : index
    %c0_70 = arith.constant 0 : index
    %257 = vector.load %arg12[%c8_69, %c0_70] : memref<16x32xf32, #tpu.memory_space<vmem>>, vector<2x32xf32>
    tpu.vector_store %arg12[%c8_69, %c0_70], %256 {strides = array<i32>} : memref<16x32xf32, #tpu.memory_space<vmem>>, vector<2x32xf32>,
    %c10 = arith.constant 10 : index
    %c0_71 = arith.constant 0 : index
    %258 = vector.load %arg14[%c10, %c0_71] : memref<16x96xf32, #tpu.memory_space<vmem>>, vector<2x96xf32>
    %cst_72 = arith.constant dense<0.000000e+00> : vector<2x96xf32>
    %259 = tpu.matmul %232, %8, %cst_72 {dimension_numbers = #tpu.dot_dimension_numbers<[1], [0], [0], [1], [0, 0, 1, 1], [], []>} : vector<2x32xf32>, vector<32x96xf32>, vector<2x96xf32> -> vector<2x96xf32>
    %260 = vector.extract_strided_slice %258 {offsets = [0, 0], sizes = [2, 64], strides = [1, 1]} : vector<2x96xf32> to vector<2x64xf32>
    %261 = vector.extract_strided_slice %259 {offsets = [0, 0], sizes = [2, 64], strides = [1, 1]} : vector<2x96xf32> to vector<2x64xf32>
    %262 = arith.addf %260, %261 : vector<2x64xf32>
    %263 = arith.negf %262 : vector<2x64xf32>
    %264 = math.exp %263 : vector<2x64xf32>
    %cst_73 = arith.constant 1.000000e+00 : f32
    %265 = vector.broadcast %cst_73 : f32 to vector<2x64xf32>
    %266 = arith.addf %265, %264 : vector<2x64xf32>
    %267 = arith.divf %265, %266 : vector<2x64xf32>
    %268 = vector.extract_strided_slice %267 {offsets = [0, 0], sizes = [2, 32], strides = [1, 1]} : vector<2x64xf32> to vector<2x32xf32>
    %269 = vector.extract_strided_slice %267 {offsets = [0, 32], sizes = [2, 32], strides = [1, 1]} : vector<2x64xf32> to vector<2x32xf32>
    %270 = vector.extract_strided_slice %258 {offsets = [0, 64], sizes = [2, 32], strides = [1, 1]} : vector<2x96xf32> to vector<2x32xf32>
    %271 = vector.extract_strided_slice %259 {offsets = [0, 64], sizes = [2, 32], strides = [1, 1]} : vector<2x96xf32> to vector<2x32xf32>
    %272 = vector.broadcast %12 : vector<1x32xf32> to vector<2x32xf32>
    %273 = arith.addf %271, %272 : vector<2x32xf32>
    %274 = arith.mulf %268, %273 : vector<2x32xf32>
    %275 = arith.addf %270, %274 : vector<2x32xf32>
    %276 = math.tanh %275 : vector<2x32xf32>
    %277 = arith.subf %232, %276 : vector<2x32xf32>
    %278 = arith.mulf %269, %277 : vector<2x32xf32>
    %279 = arith.addf %276, %278 : vector<2x32xf32>
    %cst_74 = arith.constant dense<0.000000e+00> : vector<2x96xf32>
    %280 = tpu.matmul %279, %16, %cst_74 {dimension_numbers = #tpu.dot_dimension_numbers<[1], [0], [0], [1], [0, 0, 1, 1], [], []>} : vector<2x32xf32>, vector<32x96xf32>, vector<2x96xf32> -> vector<2x96xf32>
    %281 = vector.broadcast %18 : vector<1x96xf32> to vector<2x96xf32>
    %282 = arith.addf %280, %281 : vector<2x96xf32>
    %cst_75 = arith.constant dense<0.000000e+00> : vector<2x96xf32>
    %283 = tpu.matmul %256, %10, %cst_75 {dimension_numbers = #tpu.dot_dimension_numbers<[1], [0], [0], [1], [0, 0, 1, 1], [], []>} : vector<2x32xf32>, vector<32x96xf32>, vector<2x96xf32> -> vector<2x96xf32>
    %284 = vector.extract_strided_slice %282 {offsets = [0, 0], sizes = [2, 64], strides = [1, 1]} : vector<2x96xf32> to vector<2x64xf32>
    %285 = vector.extract_strided_slice %283 {offsets = [0, 0], sizes = [2, 64], strides = [1, 1]} : vector<2x96xf32> to vector<2x64xf32>
    %286 = arith.addf %284, %285 : vector<2x64xf32>
    %287 = arith.negf %286 : vector<2x64xf32>
    %288 = math.exp %287 : vector<2x64xf32>
    %cst_76 = arith.constant 1.000000e+00 : f32
    %289 = vector.broadcast %cst_76 : f32 to vector<2x64xf32>
    %290 = arith.addf %289, %288 : vector<2x64xf32>
    %291 = arith.divf %289, %290 : vector<2x64xf32>
    %292 = vector.extract_strided_slice %291 {offsets = [0, 0], sizes = [2, 32], strides = [1, 1]} : vector<2x64xf32> to vector<2x32xf32>
    %293 = vector.extract_strided_slice %291 {offsets = [0, 32], sizes = [2, 32], strides = [1, 1]} : vector<2x64xf32> to vector<2x32xf32>
    %294 = vector.extract_strided_slice %282 {offsets = [0, 64], sizes = [2, 32], strides = [1, 1]} : vector<2x96xf32> to vector<2x32xf32>
    %295 = vector.extract_strided_slice %283 {offsets = [0, 64], sizes = [2, 32], strides = [1, 1]} : vector<2x96xf32> to vector<2x32xf32>
    %296 = vector.broadcast %14 : vector<1x32xf32> to vector<2x32xf32>
    %297 = arith.addf %295, %296 : vector<2x32xf32>
    %298 = arith.mulf %292, %297 : vector<2x32xf32>
    %299 = arith.addf %294, %298 : vector<2x32xf32>
    %300 = math.tanh %299 : vector<2x32xf32>
    %301 = arith.subf %256, %300 : vector<2x32xf32>
    %302 = arith.mulf %293, %301 : vector<2x32xf32>
    %303 = arith.addf %300, %302 : vector<2x32xf32>
    %c10_77 = arith.constant 10 : index
    %c0_78 = arith.constant 0 : index
    %304 = vector.load %arg12[%c10_77, %c0_78] : memref<16x32xf32, #tpu.memory_space<vmem>>, vector<2x32xf32>
    tpu.vector_store %arg12[%c10_77, %c0_78], %303 {strides = array<i32>} : memref<16x32xf32, #tpu.memory_space<vmem>>, vector<2x32xf32>,
    %c12 = arith.constant 12 : index
    %c0_79 = arith.constant 0 : index
    %305 = vector.load %arg14[%c12, %c0_79] : memref<16x96xf32, #tpu.memory_space<vmem>>, vector<2x96xf32>
    %cst_80 = arith.constant dense<0.000000e+00> : vector<2x96xf32>
    %306 = tpu.matmul %279, %8, %cst_80 {dimension_numbers = #tpu.dot_dimension_numbers<[1], [0], [0], [1], [0, 0, 1, 1], [], []>} : vector<2x32xf32>, vector<32x96xf32>, vector<2x96xf32> -> vector<2x96xf32>
    %307 = vector.extract_strided_slice %305 {offsets = [0, 0], sizes = [2, 64], strides = [1, 1]} : vector<2x96xf32> to vector<2x64xf32>
    %308 = vector.extract_strided_slice %306 {offsets = [0, 0], sizes = [2, 64], strides = [1, 1]} : vector<2x96xf32> to vector<2x64xf32>
    %309 = arith.addf %307, %308 : vector<2x64xf32>
    %310 = arith.negf %309 : vector<2x64xf32>
    %311 = math.exp %310 : vector<2x64xf32>
    %cst_81 = arith.constant 1.000000e+00 : f32
    %312 = vector.broadcast %cst_81 : f32 to vector<2x64xf32>
    %313 = arith.addf %312, %311 : vector<2x64xf32>
    %314 = arith.divf %312, %313 : vector<2x64xf32>
    %315 = vector.extract_strided_slice %314 {offsets = [0, 0], sizes = [2, 32], strides = [1, 1]} : vector<2x64xf32> to vector<2x32xf32>
    %316 = vector.extract_strided_slice %314 {offsets = [0, 32], sizes = [2, 32], strides = [1, 1]} : vector<2x64xf32> to vector<2x32xf32>
    %317 = vector.extract_strided_slice %305 {offsets = [0, 64], sizes = [2, 32], strides = [1, 1]} : vector<2x96xf32> to vector<2x32xf32>
    %318 = vector.extract_strided_slice %306 {offsets = [0, 64], sizes = [2, 32], strides = [1, 1]} : vector<2x96xf32> to vector<2x32xf32>
    %319 = vector.broadcast %12 : vector<1x32xf32> to vector<2x32xf32>
    %320 = arith.addf %318, %319 : vector<2x32xf32>
    %321 = arith.mulf %315, %320 : vector<2x32xf32>
    %322 = arith.addf %317, %321 : vector<2x32xf32>
    %323 = math.tanh %322 : vector<2x32xf32>
    %324 = arith.subf %279, %323 : vector<2x32xf32>
    %325 = arith.mulf %316, %324 : vector<2x32xf32>
    %326 = arith.addf %323, %325 : vector<2x32xf32>
    %cst_82 = arith.constant dense<0.000000e+00> : vector<2x96xf32>
    %327 = tpu.matmul %326, %16, %cst_82 {dimension_numbers = #tpu.dot_dimension_numbers<[1], [0], [0], [1], [0, 0, 1, 1], [], []>} : vector<2x32xf32>, vector<32x96xf32>, vector<2x96xf32> -> vector<2x96xf32>
    %328 = vector.broadcast %18 : vector<1x96xf32> to vector<2x96xf32>
    %329 = arith.addf %327, %328 : vector<2x96xf32>
    %cst_83 = arith.constant dense<0.000000e+00> : vector<2x96xf32>
    %330 = tpu.matmul %303, %10, %cst_83 {dimension_numbers = #tpu.dot_dimension_numbers<[1], [0], [0], [1], [0, 0, 1, 1], [], []>} : vector<2x32xf32>, vector<32x96xf32>, vector<2x96xf32> -> vector<2x96xf32>
    %331 = vector.extract_strided_slice %329 {offsets = [0, 0], sizes = [2, 64], strides = [1, 1]} : vector<2x96xf32> to vector<2x64xf32>
    %332 = vector.extract_strided_slice %330 {offsets = [0, 0], sizes = [2, 64], strides = [1, 1]} : vector<2x96xf32> to vector<2x64xf32>
    %333 = arith.addf %331, %332 : vector<2x64xf32>
    %334 = arith.negf %333 : vector<2x64xf32>
    %335 = math.exp %334 : vector<2x64xf32>
    %cst_84 = arith.constant 1.000000e+00 : f32
    %336 = vector.broadcast %cst_84 : f32 to vector<2x64xf32>
    %337 = arith.addf %336, %335 : vector<2x64xf32>
    %338 = arith.divf %336, %337 : vector<2x64xf32>
    %339 = vector.extract_strided_slice %338 {offsets = [0, 0], sizes = [2, 32], strides = [1, 1]} : vector<2x64xf32> to vector<2x32xf32>
    %340 = vector.extract_strided_slice %338 {offsets = [0, 32], sizes = [2, 32], strides = [1, 1]} : vector<2x64xf32> to vector<2x32xf32>
    %341 = vector.extract_strided_slice %329 {offsets = [0, 64], sizes = [2, 32], strides = [1, 1]} : vector<2x96xf32> to vector<2x32xf32>
    %342 = vector.extract_strided_slice %330 {offsets = [0, 64], sizes = [2, 32], strides = [1, 1]} : vector<2x96xf32> to vector<2x32xf32>
    %343 = vector.broadcast %14 : vector<1x32xf32> to vector<2x32xf32>
    %344 = arith.addf %342, %343 : vector<2x32xf32>
    %345 = arith.mulf %339, %344 : vector<2x32xf32>
    %346 = arith.addf %341, %345 : vector<2x32xf32>
    %347 = math.tanh %346 : vector<2x32xf32>
    %348 = arith.subf %303, %347 : vector<2x32xf32>
    %349 = arith.mulf %340, %348 : vector<2x32xf32>
    %350 = arith.addf %347, %349 : vector<2x32xf32>
    %c12_85 = arith.constant 12 : index
    %c0_86 = arith.constant 0 : index
    %351 = vector.load %arg12[%c12_85, %c0_86] : memref<16x32xf32, #tpu.memory_space<vmem>>, vector<2x32xf32>
    tpu.vector_store %arg12[%c12_85, %c0_86], %350 {strides = array<i32>} : memref<16x32xf32, #tpu.memory_space<vmem>>, vector<2x32xf32>,
    %c14 = arith.constant 14 : index
    %c0_87 = arith.constant 0 : index
    %352 = vector.load %arg14[%c14, %c0_87] : memref<16x96xf32, #tpu.memory_space<vmem>>, vector<2x96xf32>
    %cst_88 = arith.constant dense<0.000000e+00> : vector<2x96xf32>
    %353 = tpu.matmul %326, %8, %cst_88 {dimension_numbers = #tpu.dot_dimension_numbers<[1], [0], [0], [1], [0, 0, 1, 1], [], []>} : vector<2x32xf32>, vector<32x96xf32>, vector<2x96xf32> -> vector<2x96xf32>
    %354 = vector.extract_strided_slice %352 {offsets = [0, 0], sizes = [2, 64], strides = [1, 1]} : vector<2x96xf32> to vector<2x64xf32>
    %355 = vector.extract_strided_slice %353 {offsets = [0, 0], sizes = [2, 64], strides = [1, 1]} : vector<2x96xf32> to vector<2x64xf32>
    %356 = arith.addf %354, %355 : vector<2x64xf32>
    %357 = arith.negf %356 : vector<2x64xf32>
    %358 = math.exp %357 : vector<2x64xf32>
    %cst_89 = arith.constant 1.000000e+00 : f32
    %359 = vector.broadcast %cst_89 : f32 to vector<2x64xf32>
    %360 = arith.addf %359, %358 : vector<2x64xf32>
    %361 = arith.divf %359, %360 : vector<2x64xf32>
    %362 = vector.extract_strided_slice %361 {offsets = [0, 0], sizes = [2, 32], strides = [1, 1]} : vector<2x64xf32> to vector<2x32xf32>
    %363 = vector.extract_strided_slice %361 {offsets = [0, 32], sizes = [2, 32], strides = [1, 1]} : vector<2x64xf32> to vector<2x32xf32>
    %364 = vector.extract_strided_slice %352 {offsets = [0, 64], sizes = [2, 32], strides = [1, 1]} : vector<2x96xf32> to vector<2x32xf32>
    %365 = vector.extract_strided_slice %353 {offsets = [0, 64], sizes = [2, 32], strides = [1, 1]} : vector<2x96xf32> to vector<2x32xf32>
    %366 = vector.broadcast %12 : vector<1x32xf32> to vector<2x32xf32>
    %367 = arith.addf %365, %366 : vector<2x32xf32>
    %368 = arith.mulf %362, %367 : vector<2x32xf32>
    %369 = arith.addf %364, %368 : vector<2x32xf32>
    %370 = math.tanh %369 : vector<2x32xf32>
    %371 = arith.subf %326, %370 : vector<2x32xf32>
    %372 = arith.mulf %363, %371 : vector<2x32xf32>
    %373 = arith.addf %370, %372 : vector<2x32xf32>
    %cst_90 = arith.constant dense<0.000000e+00> : vector<2x96xf32>
    %374 = tpu.matmul %373, %16, %cst_90 {dimension_numbers = #tpu.dot_dimension_numbers<[1], [0], [0], [1], [0, 0, 1, 1], [], []>} : vector<2x32xf32>, vector<32x96xf32>, vector<2x96xf32> -> vector<2x96xf32>
    %375 = vector.broadcast %18 : vector<1x96xf32> to vector<2x96xf32>
    %376 = arith.addf %374, %375 : vector<2x96xf32>
    %cst_91 = arith.constant dense<0.000000e+00> : vector<2x96xf32>
    %377 = tpu.matmul %350, %10, %cst_91 {dimension_numbers = #tpu.dot_dimension_numbers<[1], [0], [0], [1], [0, 0, 1, 1], [], []>} : vector<2x32xf32>, vector<32x96xf32>, vector<2x96xf32> -> vector<2x96xf32>
    %378 = vector.extract_strided_slice %376 {offsets = [0, 0], sizes = [2, 64], strides = [1, 1]} : vector<2x96xf32> to vector<2x64xf32>
    %379 = vector.extract_strided_slice %377 {offsets = [0, 0], sizes = [2, 64], strides = [1, 1]} : vector<2x96xf32> to vector<2x64xf32>
    %380 = arith.addf %378, %379 : vector<2x64xf32>
    %381 = arith.negf %380 : vector<2x64xf32>
    %382 = math.exp %381 : vector<2x64xf32>
    %cst_92 = arith.constant 1.000000e+00 : f32
    %383 = vector.broadcast %cst_92 : f32 to vector<2x64xf32>
    %384 = arith.addf %383, %382 : vector<2x64xf32>
    %385 = arith.divf %383, %384 : vector<2x64xf32>
    %386 = vector.extract_strided_slice %385 {offsets = [0, 0], sizes = [2, 32], strides = [1, 1]} : vector<2x64xf32> to vector<2x32xf32>
    %387 = vector.extract_strided_slice %385 {offsets = [0, 32], sizes = [2, 32], strides = [1, 1]} : vector<2x64xf32> to vector<2x32xf32>
    %388 = vector.extract_strided_slice %376 {offsets = [0, 64], sizes = [2, 32], strides = [1, 1]} : vector<2x96xf32> to vector<2x32xf32>
    %389 = vector.extract_strided_slice %377 {offsets = [0, 64], sizes = [2, 32], strides = [1, 1]} : vector<2x96xf32> to vector<2x32xf32>
    %390 = vector.broadcast %14 : vector<1x32xf32> to vector<2x32xf32>
    %391 = arith.addf %389, %390 : vector<2x32xf32>
    %392 = arith.mulf %386, %391 : vector<2x32xf32>
    %393 = arith.addf %388, %392 : vector<2x32xf32>
    %394 = math.tanh %393 : vector<2x32xf32>
    %395 = arith.subf %350, %394 : vector<2x32xf32>
    %396 = arith.mulf %387, %395 : vector<2x32xf32>
    %397 = arith.addf %394, %396 : vector<2x32xf32>
    %c14_93 = arith.constant 14 : index
    %c0_94 = arith.constant 0 : index
    %398 = vector.load %arg12[%c14_93, %c0_94] : memref<16x32xf32, #tpu.memory_space<vmem>>, vector<2x32xf32>
    tpu.vector_store %arg12[%c14_93, %c0_94], %397 {strides = array<i32>} : memref<16x32xf32, #tpu.memory_space<vmem>>, vector<2x32xf32>,
    %c0_95 = arith.constant 0 : index
    %c0_96 = arith.constant 0 : index
    %c0_97 = arith.constant 0 : index
    %399 = vector.load %arg13[%c0_95, %c0_96, %c0_97] : memref<2x2x32xf32, #tpu.memory_space<vmem>>, vector<1x2x32xf32>
    %400 = vector.shape_cast %399 : vector<1x2x32xf32> to vector<2x32xf32>
    %401 = vector.shape_cast %373 : vector<2x32xf32> to vector<1x2x32xf32>
    tpu.vector_store %arg13[%c0_95, %c0_96, %c0_97], %401 {strides = array<i32>} : memref<2x2x32xf32, #tpu.memory_space<vmem>>, vector<1x2x32xf32>,
    %c1_98 = arith.constant 1 : index
    %c0_99 = arith.constant 0 : index
    %c0_100 = arith.constant 0 : index
    %402 = vector.load %arg13[%c1_98, %c0_99, %c0_100] : memref<2x2x32xf32, #tpu.memory_space<vmem>>, vector<1x2x32xf32>
    %403 = vector.shape_cast %402 : vector<1x2x32xf32> to vector<2x32xf32>
    %404 = vector.shape_cast %397 : vector<2x32xf32> to vector<1x2x32xf32>
    tpu.vector_store %arg13[%c1_98, %c0_99, %c0_100], %404 {strides = array<i32>} : memref<2x2x32xf32, #tpu.memory_space<vmem>>, vector<1x2x32xf32>,
    %c0_101 = arith.constant 0 : index
    %c0_102 = arith.constant 0 : index
    %405 = vector.load %arg12[%c0_101, %c0_102] : memref<16x32xf32, #tpu.memory_space<vmem>>, vector<16x32xf32>
    %c0_103 = arith.constant 0 : index
    %c0_104 = arith.constant 0 : index
    %406 = vector.load %arg9[%c0_103, %c0_104] : memref<32x8xf32, #tpu.memory_space<vmem>>, vector<32x8xf32>
    %cst_105 = arith.constant dense<0.000000e+00> : vector<16x8xf32>
    %407 = tpu.matmul %405, %406, %cst_105 {dimension_numbers = #tpu.dot_dimension_numbers<[1], [0], [0], [1], [0, 0, 1, 1], [], []>} : vector<16x32xf32>, vector<32x8xf32>, vector<16x8xf32> -> vector<16x8xf32>
    %c0_106 = arith.constant 0 : index
    %c0_107 = arith.constant 0 : index
    %408 = vector.load %arg10[%c0_106, %c0_107] : memref<1x8xf32, #tpu.memory_space<vmem>>, vector<1x8xf32>
    %409 = vector.broadcast %408 : vector<1x8xf32> to vector<16x8xf32>
    %410 = arith.addf %407, %409 : vector<16x8xf32>
    %c0_108 = arith.constant 0 : index
    %c0_109 = arith.constant 0 : index
    %411 = vector.load %arg11[%c0_108, %c0_109] : memref<16x8xf32, #tpu.memory_space<vmem>>, vector<16x8xf32>
    tpu.vector_store %arg11[%c0_108, %c0_109], %410 {strides = array<i32>} : memref<16x8xf32, #tpu.memory_space<vmem>>, vector<16x8xf32>,
    return
  }
  func.func @transform_0(%arg0: i32) -> (i32, i32) {
    %c0_i32 = arith.constant 0 : i32
    %c0_i32_0 = arith.constant 0 : i32
    %c0_i32_1 = arith.constant 0 : i32
    return %c0_i32, %c0_i32_0 : i32, i32
  }
  func.func @transform_1(%arg0: i32) -> (i32, i32, i32) {
    %c0_i32 = arith.constant 0 : i32
    %c0_i32_0 = arith.constant 0 : i32
    %c0_i32_1 = arith.constant 0 : i32
    %c0_i32_2 = arith.constant 0 : i32
    return %c0_i32, %c0_i32_0, %c0_i32_1 : i32, i32, i32
  }
  func.func @transform_2(%arg0: i32) -> (i32, i32) {
    %c0_i32 = arith.constant 0 : i32
    %c0_i32_0 = arith.constant 0 : i32
    %c0_i32_1 = arith.constant 0 : i32
    return %c0_i32, %c0_i32_0 : i32, i32
  }
  func.func @transform_3(%arg0: i32) -> (i32, i32) {
    %c0_i32 = arith.constant 0 : i32
    %c0_i32_0 = arith.constant 0 : i32
    %c0_i32_1 = arith.constant 0 : i32
    return %c0_i32, %c0_i32_0 : i32, i32
  }
  func.func @transform_4(%arg0: i32) -> (i32, i32, i32) {
    %c0_i32 = arith.constant 0 : i32
    %c0_i32_0 = arith.constant 0 : i32
    %c0_i32_1 = arith.constant 0 : i32
    %c0_i32_2 = arith.constant 0 : i32
    return %c0_i32, %c0_i32_0, %c0_i32_1 : i32, i32, i32
  }
  func.func @transform_5(%arg0: i32) -> (i32, i32, i32) {
    %c0_i32 = arith.constant 0 : i32
    %c0_i32_0 = arith.constant 0 : i32
    %c0_i32_1 = arith.constant 0 : i32
    %c0_i32_2 = arith.constant 0 : i32
    return %c0_i32, %c0_i32_0, %c0_i32_1 : i32, i32, i32
  }
  func.func @transform_6(%arg0: i32) -> (i32, i32, i32) {
    %c0_i32 = arith.constant 0 : i32
    %c0_i32_0 = arith.constant 0 : i32
    %c0_i32_1 = arith.constant 0 : i32
    %c0_i32_2 = arith.constant 0 : i32
    return %c0_i32, %c0_i32_0, %c0_i32_1 : i32, i32, i32
  }
  func.func @transform_7(%arg0: i32) -> (i32, i32, i32) {
    %c0_i32 = arith.constant 0 : i32
    %c0_i32_0 = arith.constant 0 : i32
    %c0_i32_1 = arith.constant 0 : i32
    %c0_i32_2 = arith.constant 0 : i32
    return %c0_i32, %c0_i32_0, %c0_i32_1 : i32, i32, i32
  }
  func.func @transform_8(%arg0: i32) -> (i32, i32) {
    %c0_i32 = arith.constant 0 : i32
    %c0_i32_0 = arith.constant 0 : i32
    %c0_i32_1 = arith.constant 0 : i32
    return %c0_i32, %c0_i32_0 : i32, i32
  }
  func.func @transform_9(%arg0: i32) -> (i32, i32) {
    %c0_i32 = arith.constant 0 : i32
    %c0_i32_0 = arith.constant 0 : i32
    %c0_i32_1 = arith.constant 0 : i32
    return %c0_i32, %c0_i32_0 : i32, i32
  }
  func.func @transform_10(%arg0: i32) -> (i32, i32) {
    %c0_i32 = arith.constant 0 : i32
    %c0_i32_0 = arith.constant 0 : i32
    %c0_i32_1 = arith.constant 0 : i32
    return %c0_i32, %c0_i32_0 : i32, i32
  }
  func.func @transform_11(%arg0: i32) -> (i32, i32) {
    %c0_i32 = arith.constant 0 : i32
    %c0_i32_0 = arith.constant 0 : i32
    %c0_i32_1 = arith.constant 0 : i32
    return %c0_i32, %c0_i32_0 : i32, i32
  }
  func.func @transform_12(%arg0: i32) -> (i32, i32, i32) {
    %c0_i32 = arith.constant 0 : i32
    %c0_i32_0 = arith.constant 0 : i32
    %c0_i32_1 = arith.constant 0 : i32
    %c0_i32_2 = arith.constant 0 : i32
    return %c0_i32, %c0_i32_0, %c0_i32_1 : i32, i32, i32
  }
}

</mosaic_0001>

<llo_original>
// kernel: tpu_custom_call.1
$region0: #{tpu_custom_call.1}
  #allocation0 [shape = 'u32[]', space=smem, size = 0x4, offset = 0x4, fixed_abs, tag = 'smem constant byte address 0x4 - core index']
  #allocation1 [shape = 'u32[72,128]{1,0:T(1,128)}', space=vmem, size = 0x9000, scoped, tag = 'internal scratch']
  #allocation2 [shape = 'f32[16,96]{1,0:T(8,128)}', space=vmem, size = 0x2000, scoped, tag = 'scratch operand']
  %s0 = inlined_call_operand.vmem [shape: f32[16,8], index: 0, kind: input, shape index: {}]
  %s1 = inlined_call_operand.vmem [shape: f32[2,2,32], index: 1, kind: input, shape index: {}]
  %s2 = inlined_call_operand.vmem [shape: f32[8,96], index: 2, kind: input, shape index: {}]
  %s3 = inlined_call_operand.vmem [shape: f32[1,96], index: 3, kind: input, shape index: {}]
  %s4 = inlined_call_operand.hbm [shape: f32[2,32,96], index: 4, kind: input, shape index: {}]
  %s5 = inlined_call_operand.vmem [shape: f32[1,32,96], index: 5, kind: input, shape index: {}]
  %s6 = inlined_call_operand.vmem [shape: f32[1,1,96], index: 6, kind: input, shape index: {}]
  %s7 = inlined_call_operand.vmem [shape: f32[2,1,32], index: 7, kind: input, shape index: {}]
  %s8 = inlined_call_operand.vmem [shape: f32[32,8], index: 8, kind: input, shape index: {}]
  %s9 = inlined_call_operand.vmem [shape: f32[1,8], index: 9, kind: input, shape index: {}]
  %s10 = inlined_call_operand.vmem [shape: f32[16,8], index: 10, kind: output, shape index: {0}]
  %s11 = inlined_call_operand.hbm [shape: f32[16,32], index: 11, kind: output, shape index: {1}]
  %s12 = inlined_call_operand.hbm [shape: f32[2,2,32], index: 12, kind: output, shape index: {2}]
  %13 = xla_tuple %s10, %s11, %s12
  %s14 = sld [smem:[#allocation0]]
  $region70: #{tpu_custom_call.1} parent=0
    _
  %s16 = ssub.s32 1, %s14
  %s17 = scalar_select 0, %s16, %s14
  $region1: #{tpu_custom_call.1} parent=0
    #allocation3 [shape = 'u8[32768]{0}', space=vmem, size = 0x8000, scoped, tag = 'input window, operand 4, single buffered']
    #allocation4 [shape = 's32[1]{0}', space=sflag, size = 0x4, scoped, tag = 'scoped memory for tpu_custom_call.1']
    #allocation5 [shape = 's32[1]{0}', space=sflag, size = 0x4, scoped, tag = 'scoped memory for tpu_custom_call.1']
    #allocation6 [shape = 'u8[8192]{0}', space=vmem, size = 0x2000, scoped, tag = 'output window, operand 1, single buffered']
    #allocation7 [shape = 'u8[2048]{0}', space=vmem, size = 0x800, scoped, tag = 'output window, operand 2, single buffered']
    #allocation8 [shape = 's32[1]{0}', space=sflag, size = 0x4, scoped, tag = 'scoped memory for tpu_custom_call.1']
    %18 = vsyncpa [#allocation4], 0
    %19 = vsyncpa [#allocation5], 0
    %20 = vsyncpa [#allocation8], 0
    // Predicated region
    $region2: #{tpu_custom_call.1} parent=1 // pred_check
      _
    $region3: #{tpu_custom_call.1} parent=1 // pred_check_branch
      %22 = sbr.rel (0) target = $region5
    $region4: #{tpu_custom_call.1} parent=1 // pred_region
      _
    $region5: #{tpu_custom_call.1} parent=1 // pred_fallthru
      _
    // Predicated region
    $region6: #{tpu_custom_call.1} parent=1 // pred_check
      _
    $region7: #{tpu_custom_call.1} parent=1 // pred_check_branch
      %24 = sbr.rel (0) target = $region9
    $region8: #{tpu_custom_call.1} parent=1 // pred_region
      _
    $region9: #{tpu_custom_call.1} parent=1 // pred_fallthru
      _
    // Predicated region
    $region10: #{tpu_custom_call.1} parent=1 // pred_check
      _
    $region11: #{tpu_custom_call.1} parent=1 // pred_check_branch
      %26 = sbr.rel (0) target = $region13
    $region12: #{tpu_custom_call.1} parent=1 // pred_region
      _
    $region13: #{tpu_custom_call.1} parent=1 // pred_fallthru
      _
    // Predicated region
    $region14: #{tpu_custom_call.1} parent=1 // pred_check
      _
    $region15: #{tpu_custom_call.1} parent=1 // pred_check_branch
      %28 = sbr.rel (0) target = $region17
    $region16: #{tpu_custom_call.1} parent=1 // pred_region
      _
    $region17: #{tpu_custom_call.1} parent=1 // pred_fallthru
      _
    // Predicated region
    $region18: #{tpu_custom_call.1} parent=1 // pred_check
      _
    $region19: #{tpu_custom_call.1} parent=1 // pred_check_branch
      %30 = sbr.rel (0) target = $region21
    $region20: #{tpu_custom_call.1} parent=1 // pred_region
      %32 = vsyncadd [#allocation4], 0
      %s33 = sshll.u32 %s4, 4
      %s34 = int_to_ptr.hbm [resolvable:$true] %s33
      %s35 = sshll.u32 [#allocation3], 4
      %s36 = int_to_ptr.vmem [resolvable:$true] %s35
      %41 = dma.hbm_to_vmem [thread:$0]  %s34, 1024, %s36, [#allocation4], 128, 128, 8
    $region21: #{tpu_custom_call.1} parent=1 // pred_fallthru
      _
    // Predicated region
    $region22: #{tpu_custom_call.1} parent=1 // pred_check
      _
    $region23: #{tpu_custom_call.1} parent=1 // pred_check_branch
      %43 = sbr.rel (0) target = $region25
    $region24: #{tpu_custom_call.1} parent=1 // pred_region
      _
    $region25: #{tpu_custom_call.1} parent=1 // pred_fallthru
      _
    // Predicated region
    $region26: #{tpu_custom_call.1} parent=1 // pred_check
      _
    $region27: #{tpu_custom_call.1} parent=1 // pred_check_branch
      %45 = sbr.rel (0) target = $region29
    $region28: #{tpu_custom_call.1} parent=1 // pred_region
      _
    $region29: #{tpu_custom_call.1} parent=1 // pred_fallthru
      _
    // Predicated region
    $region30: #{tpu_custom_call.1} parent=1 // pred_check
      _
    $region31: #{tpu_custom_call.1} parent=1 // pred_check_branch
      %47 = sbr.rel (0) target = $region33
    $region32: #{tpu_custom_call.1} parent=1 // pred_region
      _
    $region33: #{tpu_custom_call.1} parent=1 // pred_fallthru
      _
    // Predicated region
    $region34: #{tpu_custom_call.1} parent=1 // pred_check
      _
    $region35: #{tpu_custom_call.1} parent=1 // pred_check_branch
      %49 = sbr.rel (0) target = $region37
    $region36: #{tpu_custom_call.1} parent=1 // pred_region
      _
    $region37: #{tpu_custom_call.1} parent=1 // pred_fallthru
      _
    // Predicated region
    $region38: #{tpu_custom_call.1} parent=1 // pred_check
      _
    $region39: #{tpu_custom_call.1} parent=1 // pred_check_branch
      %51 = sbr.rel (0) target = $region41
    $region40: #{tpu_custom_call.1} parent=1 // pred_region
      _
    $region41: #{tpu_custom_call.1} parent=1 // pred_fallthru
      _
    // Predicated region
    $region42: #{tpu_custom_call.1} parent=1 // pred_check
      _
    $region43: #{tpu_custom_call.1} parent=1 // pred_check_branch
      %53 = sbr.rel (0) target = $region45
    $region44: #{tpu_custom_call.1} parent=1 // pred_region
      %55 = dma.done [#allocation4], 1024
    $region45: #{tpu_custom_call.1} parent=1 // pred_fallthru
      _
    %v56 = vld [vmem:[%s0] sm:$0xff]
    %v57 = vld [vmem:[%s0 + $0x8] sm:$0xff]
    %v58 = vld [vmem:[%s2] sm:$0xff]
    %v59 = vld [vmem:[%s3] sm:$0x1]
    %v61 = vperm.slane %v59, 0
    %vm63 = vcmask 64512
    %v65 = vsel %vm63, %v56, 0
    %v68 = vsel %vm63, %v57, 0
    %70 = vmatpush.msra.mxu0 0.0
    %71 = vmatpush.msra.mxu0 0.0
    %72 = vmatpush.msra.mxu0 0.0
    %73 = vmatpush.msra.mxu0 0.0
    %74 = vmatpush.msra.mxu0 0.0
    %75 = vmatpush.msra.mxu0 0.0
    %76 = vmatpush.msra.mxu0 0.0
    %77 = vmatpush.msra.mxu0 0.0
    %78 = vmatpush.msra.mxu0 0.0
    %79 = vmatpush.msra.mxu0 0.0
    %80 = vmatpush.msra.mxu0 0.0
    %81 = vmatpush.msra.mxu0 0.0
    %82 = vmatpush.msra.mxu0 0.0
    %83 = vmatpush.msra.mxu0 0.0
    %84 = vmatpush.msra.mxu0 0.0
    %85 = vmatpush.msra.mxu0 %v58
    %86 = vmatmul.f32.gmra.mxu0 %v65
    %v87 = vpop.f32.mrf.mxu0
    %v88 = vadd.f32 %v61, %v87
    %89 = vmatmul.f32.gmra.mxu0 %v68
    %v90 = vpop.f32.mrf.mxu0
    %v91 = vadd.f32 %v61, %v90
    %92 = vdwg.mxu0
    %vm93 = vcmask 785408
    %94 = vst.msk [vmem:[#allocation2] sm:$0xff] %vm93, %v88
    %95 = vst.msk [vmem:[#allocation2 + $0x8] sm:$0xff] %vm93, %v91
    %v96 = vld [vmem:[#allocation3] sm:$0xff]
    %v97 = vld [vmem:[#allocation3 + $0x8] sm:$0xff]
    %v98 = vld [vmem:[#allocation3 + $0x10] sm:$0xff]
    %v99 = vld [vmem:[#allocation3 + $0x18] sm:$0xff]
    %s100 = scalar_lea.vmem [#allocation3], 32
    %v101 = vld [vmem:[%s100] sm:$0xff]
    %v102 = vld [vmem:[%s100 + $0x8] sm:$0xff]
    %v103 = vld [vmem:[%s100 + $0x10] sm:$0xff]
    %v104 = vld [vmem:[%s100 + $0x18] sm:$0xff]
    %v105 = vld [vmem:[%s7] sm:$0x1]
    %s106 = scalar_lea.vmem %s7, 1
    %v107 = vld [vmem:[%s106] sm:$0x1]
    %v108 = vld [vmem:[%s5] sm:$0xff]
    %v109 = vld [vmem:[%s5 + $0x8] sm:$0xff]
    %v110 = vld [vmem:[%s5 + $0x10] sm:$0xff]
    %v111 = vld [vmem:[%s5 + $0x18] sm:$0xff]
    %v112 = vld [vmem:[%s6] sm:$0x1]
    %v113 = vld [vmem:[%s1] sm:$0x3]
    %s114 = scalar_lea.vmem %s1, 2
    %v115 = vld [vmem:[%s114] sm:$0x3]
    %v116 = vld [vmem:[#allocation2] sm:$0x3]
    %vm117 = vcmask 261120
    %v119 = vsel %vm117, %v113, 0
    %121 = vmatpush.msra.mxu0 0.0
    %122 = vmatpush.msra.mxu0 0.0
    %123 = vmatpush.msra.mxu0 0.0
    %124 = vmatpush.msra.mxu0 0.0
    %125 = vmatpush.msra.mxu0 0.0
    %126 = vmatpush.msra.mxu0 0.0
    %127 = vmatpush.msra.mxu0 0.0
    %128 = vmatpush.msra.mxu0 0.0
    %129 = vmatpush.msra.mxu0 0.0
    %130 = vmatpush.msra.mxu0 0.0
    %131 = vmatpush.msra.mxu0 0.0
    %132 = vmatpush.msra.mxu0 0.0
    %133 = vmatpush.msra.mxu0 %v99
    %134 = vmatpush.msra.mxu0 %v98
    %135 = vmatpush.msra.mxu0 %v97
    %136 = vmatpush.msra.mxu0 %v96
    %137 = vmatmul.f32.gmra.mxu0 %v119
    %v138 = vpop.f32.mrf.mxu0
    %v139 = vadd.f32 0.0, %v138
    %140 = vdwg.mxu0
    %v141 = vadd.f32 %v116, %v139
    %v142 = vxor.u32 %v141, 2147483648
    %v143 = vmul.f32 %v142, 1.442695
    %v144 = vpow.pop %v143
    %v145 = vadd.f32 %v144, 1.0
    %v146 = vrcp.pop %v145
    %v147 = vmul.f32 %v145, %v146
    %v148 = vsub.f32 1.0, %v147
    %v149 = vmul.f32 %v146, %v148
    %v150 = vadd.f32 %v146, %v149
    %vm151 = vweird.f32 %v145
    %vm152 = vweird.f32 %v146
    %vm153 = vmor %vm151, %vm152
    %v154 = vsel %vm153, %v146, %v150
    %v155 = vand.u32 2147483647, %v145
    %vm156 = vcmp.eq.f32.partialorder %v155, 8.507059e+37
    %v157 = vand.u32 %v145, 2147483648
    %v158 = vor.u32 1.1754944e-38, %v157
    %v159 = vsel %vm156, %v158, %v154
    %v160 = vmul.f32 1.0, %v159
    %v162 = vperm.slane %v105, 0
    %163 = vrot.lane.b32.xlu0 %v162, 64
    %v164 = vpop.permute.xlu0 %163
    %v166 = vadd.f32 %v139, %v164
    %168 = vrot.lane.b32.xlu0 %v166, 64
    %v169 = vpop.permute.xlu0 %168
    %v171 = vmul.f32 %v160, %v169
    %173 = vrot.lane.b32.xlu0 %v171, 64
    %v174 = vpop.permute.xlu0 %173
    %v176 = vadd.f32 %v116, %v174
    %v177 = vtanh.pop %v176
    %179 = vrot.lane.b32.xlu0 %v177, 64
    %v180 = vpop.permute.xlu0 %179
    %v182 = vsub.f32 %v113, %v180
    %184 = vrot.lane.b32.xlu0 %v182, 32
    %v185 = vpop.permute.xlu0 %184
    %v187 = vmul.f32 %v160, %v185
    %189 = vrot.lane.b32.xlu0 %v187, 32
    %v190 = vpop.permute.xlu0 %189
    %v192 = vadd.f32 %v177, %v190
    %v194 = vperm.slane %v112, 0
    %197 = vrot.lane.b32.xlu0 %v192, 64
    %v198 = vpop.permute.xlu0 %197
    %v199 = vsel %vm117, %v198, 0
    %201 = vmatpush.msra.mxu0 0.0
    %202 = vmatpush.msra.mxu0 0.0
    %203 = vmatpush.msra.mxu0 0.0
    %204 = vmatpush.msra.mxu0 0.0
    %205 = vmatpush.msra.mxu0 0.0
    %206 = vmatpush.msra.mxu0 0.0
    %207 = vmatpush.msra.mxu0 0.0
    %208 = vmatpush.msra.mxu0 0.0
    %209 = vmatpush.msra.mxu0 0.0
    %210 = vmatpush.msra.mxu0 0.0
    %211 = vmatpush.msra.mxu0 0.0
    %212 = vmatpush.msra.mxu0 0.0
    %213 = vmatpush.msra.mxu0 %v111
    %214 = vmatpush.msra.mxu0 %v110
    %215 = vmatpush.msra.mxu0 %v109
    %216 = vmatpush.msra.mxu0 %v108
    %217 = vmatmul.f32.gmra.mxu0 %v199
    %v218 = vpop.f32.mrf.mxu0
    %v219 = vadd.f32 %v194, %v218
    %220 = vdwg.mxu0
    %v222 = vsel %vm117, %v115, 0
    %224 = vmatpush.msra.mxu0 0.0
    %225 = vmatpush.msra.mxu0 0.0
    %226 = vmatpush.msra.mxu0 0.0
    %227 = vmatpush.msra.mxu0 0.0
    %228 = vmatpush.msra.mxu0 0.0
    %229 = vmatpush.msra.mxu0 0.0
    %230 = vmatpush.msra.mxu0 0.0
    %231 = vmatpush.msra.mxu0 0.0
    %232 = vmatpush.msra.mxu0 0.0
    %233 = vmatpush.msra.mxu0 0.0
    %234 = vmatpush.msra.mxu0 0.0
    %235 = vmatpush.msra.mxu0 0.0
    %236 = vmatpush.msra.mxu0 %v104
    %237 = vmatpush.msra.mxu0 %v103
    %238 = vmatpush.msra.mxu0 %v102
    %239 = vmatpush.msra.mxu0 %v101
    %240 = vmatmul.f32.gmra.mxu0 %v222
    %v241 = vpop.f32.mrf.mxu0
    %v242 = vadd.f32 0.0, %v241
    %243 = vdwg.mxu0
    %v244 = vadd.f32 %v219, %v242
    %v245 = vxor.u32 %v244, 2147483648
    %v246 = vmul.f32 %v245, 1.442695
    %v247 = vpow.pop %v246
    %v248 = vadd.f32 %v247, 1.0
    %v249 = vrcp.pop %v248
    %v250 = vmul.f32 %v248, %v249
    %v251 = vsub.f32 1.0, %v250
    %v252 = vmul.f32 %v249, %v251
    %v253 = vadd.f32 %v249, %v252
    %vm254 = vweird.f32 %v248
    %vm255 = vweird.f32 %v249
    %vm256 = vmor %vm254, %vm255
    %v257 = vsel %vm256, %v249, %v253
    %v258 = vand.u32 2147483647, %v248
    %vm259 = vcmp.eq.f32.partialorder %v258, 8.507059e+37
    %v260 = vand.u32 %v248, 2147483648
    %v261 = vor.u32 1.1754944e-38, %v260
    %v262 = vsel %vm259, %v261, %v257
    %v263 = vmul.f32 1.0, %v262
    %v265 = vperm.slane %v107, 0
    %266 = vrot.lane.b32.xlu0 %v265, 64
    %v267 = vpop.permute.xlu0 %266
    %v269 = vadd.f32 %v242, %v267
    %271 = vrot.lane.b32.xlu0 %v269, 64
    %v272 = vpop.permute.xlu0 %271
    %v274 = vmul.f32 %v263, %v272
    %276 = vrot.lane.b32.xlu0 %v274, 64
    %v277 = vpop.permute.xlu0 %276
    %v279 = vadd.f32 %v219, %v277
    %v280 = vtanh.pop %v279
    %282 = vrot.lane.b32.xlu0 %v280, 64
    %v283 = vpop.permute.xlu0 %282
    %v285 = vsub.f32 %v115, %v283
    %287 = vrot.lane.b32.xlu0 %v285, 32
    %v288 = vpop.permute.xlu0 %287
    %v290 = vmul.f32 %v263, %v288
    %292 = vrot.lane.b32.xlu0 %v290, 32
    %v293 = vpop.permute.xlu0 %292
    %v295 = vadd.f32 %v280, %v293
    %297 = vrot.lane.b32.xlu0 %v295, 64
    %v298 = vpop.permute.xlu0 %297
    %vm300 = vcmask 254976
    %301 = vst.msk [vmem:[#allocation6] sm:$0x3] %vm300, %v298
    %v302 = vld [vmem:[#allocation2 + $0x2] sm:$0x3]
    %303 = vmatpush.msra.mxu0 0.0
    %304 = vmatpush.msra.mxu0 0.0
    %305 = vmatpush.msra.mxu0 0.0
    %306 = vmatpush.msra.mxu0 0.0
    %307 = vmatpush.msra.mxu0 0.0
    %308 = vmatpush.msra.mxu0 0.0
    %309 = vmatpush.msra.mxu0 0.0
    %310 = vmatpush.msra.mxu0 0.0
    %311 = vmatpush.msra.mxu0 0.0
    %312 = vmatpush.msra.mxu0 0.0
    %313 = vmatpush.msra.mxu0 0.0
    %314 = vmatpush.msra.mxu0 0.0
    %315 = vmatpush.msra.mxu0 %v99
    %316 = vmatpush.msra.mxu0 %v98
    %317 = vmatpush.msra.mxu0 %v97
    %318 = vmatpush.msra.mxu0 %v96
    %319 = vmatmul.f32.gmra.mxu0 %v199
    %v320 = vpop.f32.mrf.mxu0
    %v321 = vadd.f32 0.0, %v320
    %322 = vdwg.mxu0
    %v323 = vadd.f32 %v302, %v321
    %v324 = vxor.u32 %v323, 2147483648
    %v325 = vmul.f32 %v324, 1.442695
    %v326 = vpow.pop %v325
    %v327 = vadd.f32 %v326, 1.0
    %v328 = vrcp.pop %v327
    %v329 = vmul.f32 %v327, %v328
    %v330 = vsub.f32 1.0, %v329
    %v331 = vmul.f32 %v328, %v330
    %v332 = vadd.f32 %v328, %v331
    %vm333 = vweird.f32 %v327
    %vm334 = vweird.f32 %v328
    %vm335 = vmor %vm333, %vm334
    %v336 = vsel %vm335, %v328, %v332
    %v337 = vand.u32 2147483647, %v327
    %vm338 = vcmp.eq.f32.partialorder %v337, 8.507059e+37
    %v339 = vand.u32 %v327, 2147483648
    %v340 = vor.u32 1.1754944e-38, %v339
    %v341 = vsel %vm338, %v340, %v336
    %v342 = vmul.f32 1.0, %v341
    %v343 = vadd.f32 %v321, %v164
    %345 = vrot.lane.b32.xlu0 %v343, 64
    %v346 = vpop.permute.xlu0 %345
    %v348 = vmul.f32 %v342, %v346
    %350 = vrot.lane.b32.xlu0 %v348, 64
    %v351 = vpop.permute.xlu0 %350
    %v353 = vadd.f32 %v302, %v351
    %v354 = vtanh.pop %v353
    %v355 = vsub.f32 %v192, %v354
    %357 = vrot.lane.b32.xlu0 %v355, 96
    %v358 = vpop.permute.xlu0 %357
    %v360 = vmul.f32 %v342, %v358
    %362 = vrot.lane.b32.xlu0 %v360, 32
    %v363 = vpop.permute.xlu0 %362
    %v365 = vadd.f32 %v354, %v363
    %367 = vrot.lane.b32.xlu0 %v365, 64
    %v368 = vpop.permute.xlu0 %367
    %v369 = vsel %vm117, %v368, 0
    %371 = vmatpush.msra.mxu0 0.0
    %372 = vmatpush.msra.mxu0 0.0
    %373 = vmatpush.msra.mxu0 0.0
    %374 = vmatpush.msra.mxu0 0.0
    %375 = vmatpush.msra.mxu0 0.0
    %376 = vmatpush.msra.mxu0 0.0
    %377 = vmatpush.msra.mxu0 0.0
    %378 = vmatpush.msra.mxu0 0.0
    %379 = vmatpush.msra.mxu0 0.0
    %380 = vmatpush.msra.mxu0 0.0
    %381 = vmatpush.msra.mxu0 0.0
    %382 = vmatpush.msra.mxu0 0.0
    %383 = vmatpush.msra.mxu0 %v111
    %384 = vmatpush.msra.mxu0 %v110
    %385 = vmatpush.msra.mxu0 %v109
    %386 = vmatpush.msra.mxu0 %v108
    %387 = vmatmul.f32.gmra.mxu0 %v369
    %v388 = vpop.f32.mrf.mxu0
    %v389 = vadd.f32 %v194, %v388
    %390 = vdwg.mxu0
    %v391 = vsel %vm117, %v298, 0
    %393 = vmatpush.msra.mxu0 0.0
    %394 = vmatpush.msra.mxu0 0.0
    %395 = vmatpush.msra.mxu0 0.0
    %396 = vmatpush.msra.mxu0 0.0
    %397 = vmatpush.msra.mxu0 0.0
    %398 = vmatpush.msra.mxu0 0.0
    %399 = vmatpush.msra.mxu0 0.0
    %400 = vmatpush.msra.mxu0 0.0
    %401 = vmatpush.msra.mxu0 0.0
    %402 = vmatpush.msra.mxu0 0.0
    %403 = vmatpush.msra.mxu0 0.0
    %404 = vmatpush.msra.mxu0 0.0
    %405 = vmatpush.msra.mxu0 %v104
    %406 = vmatpush.msra.mxu0 %v103
    %407 = vmatpush.msra.mxu0 %v102
    %408 = vmatpush.msra.mxu0 %v101
    %409 = vmatmul.f32.gmra.mxu0 %v391
    %v410 = vpop.f32.mrf.mxu0
    %v411 = vadd.f32 0.0, %v410
    %412 = vdwg.mxu0
    %v413 = vadd.f32 %v389, %v411
    %v414 = vxor.u32 %v413, 2147483648
    %v415 = vmul.f32 %v414, 1.442695
    %v416 = vpow.pop %v415
    %v417 = vadd.f32 %v416, 1.0
    %v418 = vrcp.pop %v417
    %v419 = vmul.f32 %v417, %v418
    %v420 = vsub.f32 1.0, %v419
    %v421 = vmul.f32 %v418, %v420
    %v422 = vadd.f32 %v418, %v421
    %vm423 = vweird.f32 %v417
    %vm424 = vweird.f32 %v418
    %vm425 = vmor %vm423, %vm424
    %v426 = vsel %vm425, %v418, %v422
    %v427 = vand.u32 2147483647, %v417
    %vm428 = vcmp.eq.f32.partialorder %v427, 8.507059e+37
    %v429 = vand.u32 %v417, 2147483648
    %v430 = vor.u32 1.1754944e-38, %v429
    %v431 = vsel %vm428, %v430, %v426
    %v432 = vmul.f32 1.0, %v431
    %v433 = vadd.f32 %v411, %v267
    %435 = vrot.lane.b32.xlu0 %v433, 64
    %v436 = vpop.permute.xlu0 %435
    %v438 = vmul.f32 %v432, %v436
    %440 = vrot.lane.b32.xlu0 %v438, 64
    %v441 = vpop.permute.xlu0 %440
    %v443 = vadd.f32 %v389, %v441
    %v444 = vtanh.pop %v443
    %v445 = vsub.f32 %v295, %v444
    %447 = vrot.lane.b32.xlu0 %v445, 96
    %v448 = vpop.permute.xlu0 %447
    %v450 = vmul.f32 %v432, %v448
    %452 = vrot.lane.b32.xlu0 %v450, 32
    %v453 = vpop.permute.xlu0 %452
    %v455 = vadd.f32 %v444, %v453
    %457 = vrot.lane.b32.xlu0 %v455, 64
    %v458 = vpop.permute.xlu0 %457
    %460 = vst.msk [vmem:[#allocation6 + $0x2] sm:$0x3] %vm300, %v458
    %v461 = vld [vmem:[#allocation2 + $0x4] sm:$0x3]
    %462 = vmatpush.msra.mxu0 0.0
    %463 = vmatpush.msra.mxu0 0.0
    %464 = vmatpush.msra.mxu0 0.0
    %465 = vmatpush.msra.mxu0 0.0
    %466 = vmatpush.msra.mxu0 0.0
    %467 = vmatpush.msra.mxu0 0.0
    %468 = vmatpush.msra.mxu0 0.0
    %469 = vmatpush.msra.mxu0 0.0
    %470 = vmatpush.msra.mxu0 0.0
    %471 = vmatpush.msra.mxu0 0.0
    %472 = vmatpush.msra.mxu0 0.0
    %473 = vmatpush.msra.mxu0 0.0
    %474 = vmatpush.msra.mxu0 %v99
    %475 = vmatpush.msra.mxu0 %v98
    %476 = vmatpush.msra.mxu0 %v97
    %477 = vmatpush.msra.mxu0 %v96
    %478 = vmatmul.f32.gmra.mxu0 %v369
    %v479 = vpop.f32.mrf.mxu0
    %v480 = vadd.f32 0.0, %v479
    %481 = vdwg.mxu0
    %v482 = vadd.f32 %v461, %v480
    %v483 = vxor.u32 %v482, 2147483648
    %v484 = vmul.f32 %v483, 1.442695
    %v485 = vpow.pop %v484
    %v486 = vadd.f32 %v485, 1.0
    %v487 = vrcp.pop %v486
    %v488 = vmul.f32 %v486, %v487
    %v489 = vsub.f32 1.0, %v488
    %v490 = vmul.f32 %v487, %v489
    %v491 = vadd.f32 %v487, %v490
    %vm492 = vweird.f32 %v486
    %vm493 = vweird.f32 %v487
    %vm494 = vmor %vm492, %vm493
    %v495 = vsel %vm494, %v487, %v491
    %v496 = vand.u32 2147483647, %v486
    %vm497 = vcmp.eq.f32.partialorder %v496, 8.507059e+37
    %v498 = vand.u32 %v486, 2147483648
    %v499 = vor.u32 1.1754944e-38, %v498
    %v500 = vsel %vm497, %v499, %v495
    %v501 = vmul.f32 1.0, %v500
    %v502 = vadd.f32 %v480, %v164
    %504 = vrot.lane.b32.xlu0 %v502, 64
    %v505 = vpop.permute.xlu0 %504
    %v507 = vmul.f32 %v501, %v505
    %509 = vrot.lane.b32.xlu0 %v507, 64
    %v510 = vpop.permute.xlu0 %509
    %v512 = vadd.f32 %v461, %v510
    %v513 = vtanh.pop %v512
    %v514 = vsub.f32 %v365, %v513
    %516 = vrot.lane.b32.xlu0 %v514, 96
    %v517 = vpop.permute.xlu0 %516
    %v519 = vmul.f32 %v501, %v517
    %521 = vrot.lane.b32.xlu0 %v519, 32
    %v522 = vpop.permute.xlu0 %521
    %v524 = vadd.f32 %v513, %v522
    %526 = vrot.lane.b32.xlu0 %v524, 64
    %v527 = vpop.permute.xlu0 %526
    %v528 = vsel %vm117, %v527, 0
    %530 = vmatpush.msra.mxu0 0.0
    %531 = vmatpush.msra.mxu0 0.0
    %532 = vmatpush.msra.mxu0 0.0
    %533 = vmatpush.msra.mxu0 0.0
    %534 = vmatpush.msra.mxu0 0.0
    %535 = vmatpush.msra.mxu0 0.0
    %536 = vmatpush.msra.mxu0 0.0
    %537 = vmatpush.msra.mxu0 0.0
    %538 = vmatpush.msra.mxu0 0.0
    %539 = vmatpush.msra.mxu0 0.0
    %540 = vmatpush.msra.mxu0 0.0
    %541 = vmatpush.msra.mxu0 0.0
    %542 = vmatpush.msra.mxu0 %v111
    %543 = vmatpush.msra.mxu0 %v110
    %544 = vmatpush.msra.mxu0 %v109
    %545 = vmatpush.msra.mxu0 %v108
    %546 = vmatmul.f32.gmra.mxu0 %v528
    %v547 = vpop.f32.mrf.mxu0
    %v548 = vadd.f32 %v194, %v547
    %549 = vdwg.mxu0
    %v550 = vsel %vm117, %v458, 0
    %552 = vmatpush.msra.mxu0 0.0
    %553 = vmatpush.msra.mxu0 0.0
    %554 = vmatpush.msra.mxu0 0.0
    %555 = vmatpush.msra.mxu0 0.0
    %556 = vmatpush.msra.mxu0 0.0
    %557 = vmatpush.msra.mxu0 0.0
    %558 = vmatpush.msra.mxu0 0.0
    %559 = vmatpush.msra.mxu0 0.0
    %560 = vmatpush.msra.mxu0 0.0
    %561 = vmatpush.msra.mxu0 0.0
    %562 = vmatpush.msra.mxu0 0.0
    %563 = vmatpush.msra.mxu0 0.0
    %564 = vmatpush.msra.mxu0 %v104
    %565 = vmatpush.msra.mxu0 %v103
    %566 = vmatpush.msra.mxu0 %v102
    %567 = vmatpush.msra.mxu0 %v101
    %568 = vmatmul.f32.gmra.mxu0 %v550
    %v569 = vpop.f32.mrf.mxu0
    %v570 = vadd.f32 0.0, %v569
    %571 = vdwg.mxu0
    %v572 = vadd.f32 %v548, %v570
    %v573 = vxor.u32 %v572, 2147483648
    %v574 = vmul.f32 %v573, 1.442695
    %v575 = vpow.pop %v574
    %v576 = vadd.f32 %v575, 1.0
    %v577 = vrcp.pop %v576
    %v578 = vmul.f32 %v576, %v577
    %v579 = vsub.f32 1.0, %v578
    %v580 = vmul.f32 %v577, %v579
    %v581 = vadd.f32 %v577, %v580
    %vm582 = vweird.f32 %v576
    %vm583 = vweird.f32 %v577
    %vm584 = vmor %vm582, %vm583
    %v585 = vsel %vm584, %v577, %v581
    %v586 = vand.u32 2147483647, %v576
    %vm587 = vcmp.eq.f32.partialorder %v586, 8.507059e+37
    %v588 = vand.u32 %v576, 2147483648
    %v589 = vor.u32 1.1754944e-38, %v588
    %v590 = vsel %vm587, %v589, %v585
    %v591 = vmul.f32 1.0, %v590
    %v592 = vadd.f32 %v570, %v267
    %594 = vrot.lane.b32.xlu0 %v592, 64
    %v595 = vpop.permute.xlu0 %594
    %v597 = vmul.f32 %v591, %v595
    %599 = vrot.lane.b32.xlu0 %v597, 64
    %v600 = vpop.permute.xlu0 %599
    %v602 = vadd.f32 %v548, %v600
    %v603 = vtanh.pop %v602
    %v604 = vsub.f32 %v455, %v603
    %606 = vrot.lane.b32.xlu0 %v604, 96
    %v607 = vpop.permute.xlu0 %606
    %v609 = vmul.f32 %v591, %v607
    %611 = vrot.lane.b32.xlu0 %v609, 32
    %v612 = vpop.permute.xlu0 %611
    %v614 = vadd.f32 %v603, %v612
    %616 = vrot.lane.b32.xlu0 %v614, 64
    %v617 = vpop.permute.xlu0 %616
    %619 = vst.msk [vmem:[#allocation6 + $0x4] sm:$0x3] %vm300, %v617
    %v620 = vld [vmem:[#allocation2 + $0x6] sm:$0x3]
    %621 = vmatpush.msra.mxu0 0.0
    %622 = vmatpush.msra.mxu0 0.0
    %623 = vmatpush.msra.mxu0 0.0
    %624 = vmatpush.msra.mxu0 0.0
    %625 = vmatpush.msra.mxu0 0.0
    %626 = vmatpush.msra.mxu0 0.0
    %627 = vmatpush.msra.mxu0 0.0
    %628 = vmatpush.msra.mxu0 0.0
    %629 = vmatpush.msra.mxu0 0.0
    %630 = vmatpush.msra.mxu0 0.0
    %631 = vmatpush.msra.mxu0 0.0
    %632 = vmatpush.msra.mxu0 0.0
    %633 = vmatpush.msra.mxu0 %v99
    %634 = vmatpush.msra.mxu0 %v98
    %635 = vmatpush.msra.mxu0 %v97
    %636 = vmatpush.msra.mxu0 %v96
    %637 = vmatmul.f32.gmra.mxu0 %v528
    %v638 = vpop.f32.mrf.mxu0
    %v639 = vadd.f32 0.0, %v638
    %640 = vdwg.mxu0
    %v641 = vadd.f32 %v620, %v639
    %v642 = vxor.u32 %v641, 2147483648
    %v643 = vmul.f32 %v642, 1.442695
    %v644 = vpow.pop %v643
    %v645 = vadd.f32 %v644, 1.0
    %v646 = vrcp.pop %v645
    %v647 = vmul.f32 %v645, %v646
    %v648 = vsub.f32 1.0, %v647
    %v649 = vmul.f32 %v646, %v648
    %v650 = vadd.f32 %v646, %v649
    %vm651 = vweird.f32 %v645
    %vm652 = vweird.f32 %v646
    %vm653 = vmor %vm651, %vm652
    %v654 = vsel %vm653, %v646, %v650
    %v655 = vand.u32 2147483647, %v645
    %vm656 = vcmp.eq.f32.partialorder %v655, 8.507059e+37
    %v657 = vand.u32 %v645, 2147483648
    %v658 = vor.u32 1.1754944e-38, %v657
    %v659 = vsel %vm656, %v658, %v654
    %v660 = vmul.f32 1.0, %v659
    %v661 = vadd.f32 %v639, %v164
    %663 = vrot.lane.b32.xlu0 %v661, 64
    %v664 = vpop.permute.xlu0 %663
    %v666 = vmul.f32 %v660, %v664
    %668 = vrot.lane.b32.xlu0 %v666, 64
    %v669 = vpop.permute.xlu0 %668
    %v671 = vadd.f32 %v620, %v669
    %v672 = vtanh.pop %v671
    %v673 = vsub.f32 %v524, %v672
    %675 = vrot.lane.b32.xlu0 %v673, 96
    %v676 = vpop.permute.xlu0 %675
    %v678 = vmul.f32 %v660, %v676
    %680 = vrot.lane.b32.xlu0 %v678, 32
    %v681 = vpop.permute.xlu0 %680
    %v683 = vadd.f32 %v672, %v681
    %685 = vrot.lane.b32.xlu0 %v683, 64
    %v686 = vpop.permute.xlu0 %685
    %v687 = vsel %vm117, %v686, 0
    %689 = vmatpush.msra.mxu0 0.0
    %690 = vmatpush.msra.mxu0 0.0
    %691 = vmatpush.msra.mxu0 0.0
    %692 = vmatpush.msra.mxu0 0.0
    %693 = vmatpush.msra.mxu0 0.0
    %694 = vmatpush.msra.mxu0 0.0
    %695 = vmatpush.msra.mxu0 0.0
    %696 = vmatpush.msra.mxu0 0.0
    %697 = vmatpush.msra.mxu0 0.0
    %698 = vmatpush.msra.mxu0 0.0
    %699 = vmatpush.msra.mxu0 0.0
    %700 = vmatpush.msra.mxu0 0.0
    %701 = vmatpush.msra.mxu0 %v111
    %702 = vmatpush.msra.mxu0 %v110
    %703 = vmatpush.msra.mxu0 %v109
    %704 = vmatpush.msra.mxu0 %v108
    %705 = vmatmul.f32.gmra.mxu0 %v687
    %v706 = vpop.f32.mrf.mxu0
    %v707 = vadd.f32 %v194, %v706
    %708 = vdwg.mxu0
    %v709 = vsel %vm117, %v617, 0
    %711 = vmatpush.msra.mxu0 0.0
    %712 = vmatpush.msra.mxu0 0.0
    %713 = vmatpush.msra.mxu0 0.0
    %714 = vmatpush.msra.mxu0 0.0
    %715 = vmatpush.msra.mxu0 0.0
    %716 = vmatpush.msra.mxu0 0.0
    %717 = vmatpush.msra.mxu0 0.0
    %718 = vmatpush.msra.mxu0 0.0
    %719 = vmatpush.msra.mxu0 0.0
    %720 = vmatpush.msra.mxu0 0.0
    %721 = vmatpush.msra.mxu0 0.0
    %722 = vmatpush.msra.mxu0 0.0
    %723 = vmatpush.msra.mxu0 %v104
    %724 = vmatpush.msra.mxu0 %v103
    %725 = vmatpush.msra.mxu0 %v102
    %726 = vmatpush.msra.mxu0 %v101
    %727 = vmatmul.f32.gmra.mxu0 %v709
    %v728 = vpop.f32.mrf.mxu0
    %v729 = vadd.f32 0.0, %v728
    %730 = vdwg.mxu0
    %v731 = vadd.f32 %v707, %v729
    %v732 = vxor.u32 %v731, 2147483648
    %v733 = vmul.f32 %v732, 1.442695
    %v734 = vpow.pop %v733
    %v735 = vadd.f32 %v734, 1.0
    %v736 = vrcp.pop %v735
    %v737 = vmul.f32 %v735, %v736
    %v738 = vsub.f32 1.0, %v737
    %v739 = vmul.f32 %v736, %v738
    %v740 = vadd.f32 %v736, %v739
    %vm741 = vweird.f32 %v735
    %vm742 = vweird.f32 %v736
    %vm743 = vmor %vm741, %vm742
    %v744 = vsel %vm743, %v736, %v740
    %v745 = vand.u32 2147483647, %v735
    %vm746 = vcmp.eq.f32.partialorder %v745, 8.507059e+37
    %v747 = vand.u32 %v735, 2147483648
    %v748 = vor.u32 1.1754944e-38, %v747
    %v749 = vsel %vm746, %v748, %v744
    %v750 = vmul.f32 1.0, %v749
    %v751 = vadd.f32 %v729, %v267
    %753 = vrot.lane.b32.xlu0 %v751, 64
    %v754 = vpop.permute.xlu0 %753
    %v756 = vmul.f32 %v750, %v754
    %758 = vrot.lane.b32.xlu0 %v756, 64
    %v759 = vpop.permute.xlu0 %758
    %v761 = vadd.f32 %v707, %v759
    %v762 = vtanh.pop %v761
    %v763 = vsub.f32 %v614, %v762
    %765 = vrot.lane.b32.xlu0 %v763, 96
    %v766 = vpop.permute.xlu0 %765
    %v768 = vmul.f32 %v750, %v766
    %770 = vrot.lane.b32.xlu0 %v768, 32
    %v771 = vpop.permute.xlu0 %770
    %v773 = vadd.f32 %v762, %v771
    %775 = vrot.lane.b32.xlu0 %v773, 64
    %v776 = vpop.permute.xlu0 %775
    %778 = vst.msk [vmem:[#allocation6 + $0x6] sm:$0x3] %vm300, %v776
    %v779 = vld [vmem:[#allocation2 + $0x8] sm:$0x3]
    %780 = vmatpush.msra.mxu0 0.0
    %781 = vmatpush.msra.mxu0 0.0
    %782 = vmatpush.msra.mxu0 0.0
    %783 = vmatpush.msra.mxu0 0.0
    %784 = vmatpush.msra.mxu0 0.0
    %785 = vmatpush.msra.mxu0 0.0
    %786 = vmatpush.msra.mxu0 0.0
    %787 = vmatpush.msra.mxu0 0.0
    %788 = vmatpush.msra.mxu0 0.0
    %789 = vmatpush.msra.mxu0 0.0
    %790 = vmatpush.msra.mxu0 0.0
    %791 = vmatpush.msra.mxu0 0.0
    %792 = vmatpush.msra.mxu0 %v99
    %793 = vmatpush.msra.mxu0 %v98
    %794 = vmatpush.msra.mxu0 %v97
    %795 = vmatpush.msra.mxu0 %v96
    %796 = vmatmul.f32.gmra.mxu0 %v687
    %v797 = vpop.f32.mrf.mxu0
    %v798 = vadd.f32 0.0, %v797
    %799 = vdwg.mxu0
    %v800 = vadd.f32 %v779, %v798
    %v801 = vxor.u32 %v800, 2147483648
    %v802 = vmul.f32 %v801, 1.442695
    %v803 = vpow.pop %v802
    %v804 = vadd.f32 %v803, 1.0
    %v805 = vrcp.pop %v804
    %v806 = vmul.f32 %v804, %v805
    %v807 = vsub.f32 1.0, %v806
    %v808 = vmul.f32 %v805, %v807
    %v809 = vadd.f32 %v805, %v808
    %vm810 = vweird.f32 %v804
    %vm811 = vweird.f32 %v805
    %vm812 = vmor %vm810, %vm811
    %v813 = vsel %vm812, %v805, %v809
    %v814 = vand.u32 2147483647, %v804
    %vm815 = vcmp.eq.f32.partialorder %v814, 8.507059e+37
    %v816 = vand.u32 %v804, 2147483648
    %v817 = vor.u32 1.1754944e-38, %v816
    %v818 = vsel %vm815, %v817, %v813
    %v819 = vmul.f32 1.0, %v818
    %v820 = vadd.f32 %v798, %v164
    %822 = vrot.lane.b32.xlu0 %v820, 64
    %v823 = vpop.permute.xlu0 %822
    %v825 = vmul.f32 %v819, %v823
    %827 = vrot.lane.b32.xlu0 %v825, 64
    %v828 = vpop.permute.xlu0 %827
    %v830 = vadd.f32 %v779, %v828
    %v831 = vtanh.pop %v830
    %v832 = vsub.f32 %v683, %v831
    %834 = vrot.lane.b32.xlu0 %v832, 96
    %v835 = vpop.permute.xlu0 %834
    %v837 = vmul.f32 %v819, %v835
    %839 = vrot.lane.b32.xlu0 %v837, 32
    %v840 = vpop.permute.xlu0 %839
    %v842 = vadd.f32 %v831, %v840
    %844 = vrot.lane.b32.xlu0 %v842, 64
    %v845 = vpop.permute.xlu0 %844
    %v846 = vsel %vm117, %v845, 0
    %848 = vmatpush.msra.mxu0 0.0
    %849 = vmatpush.msra.mxu0 0.0
    %850 = vmatpush.msra.mxu0 0.0
    %851 = vmatpush.msra.mxu0 0.0
    %852 = vmatpush.msra.mxu0 0.0
    %853 = vmatpush.msra.mxu0 0.0
    %854 = vmatpush.msra.mxu0 0.0
    %855 = vmatpush.msra.mxu0 0.0
    %856 = vmatpush.msra.mxu0 0.0
    %857 = vmatpush.msra.mxu0 0.0
    %858 = vmatpush.msra.mxu0 0.0
    %859 = vmatpush.msra.mxu0 0.0
    %860 = vmatpush.msra.mxu0 %v111
    %861 = vmatpush.msra.mxu0 %v110
    %862 = vmatpush.msra.mxu0 %v109
    %863 = vmatpush.msra.mxu0 %v108
    %864 = vmatmul.f32.gmra.mxu0 %v846
    %v865 = vpop.f32.mrf.mxu0
    %v866 = vadd.f32 %v194, %v865
    %867 = vdwg.mxu0
    %v868 = vsel %vm117, %v776, 0
    %870 = vmatpush.msra.mxu0 0.0
    %871 = vmatpush.msra.mxu0 0.0
    %872 = vmatpush.msra.mxu0 0.0
    %873 = vmatpush.msra.mxu0 0.0
    %874 = vmatpush.msra.mxu0 0.0
    %875 = vmatpush.msra.mxu0 0.0
    %876 = vmatpush.msra.mxu0 0.0
    %877 = vmatpush.msra.mxu0 0.0
    %878 = vmatpush.msra.mxu0 0.0
    %879 = vmatpush.msra.mxu0 0.0
    %880 = vmatpush.msra.mxu0 0.0
    %881 = vmatpush.msra.mxu0 0.0
    %882 = vmatpush.msra.mxu0 %v104
    %883 = vmatpush.msra.mxu0 %v103
    %884 = vmatpush.msra.mxu0 %v102
    %885 = vmatpush.msra.mxu0 %v101
    %886 = vmatmul.f32.gmra.mxu0 %v868
    %v887 = vpop.f32.mrf.mxu0
    %v888 = vadd.f32 0.0, %v887
    %889 = vdwg.mxu0
    %v890 = vadd.f32 %v866, %v888
    %v891 = vxor.u32 %v890, 2147483648
    %v892 = vmul.f32 %v891, 1.442695
    %v893 = vpow.pop %v892
    %v894 = vadd.f32 %v893, 1.0
    %v895 = vrcp.pop %v894
    %v896 = vmul.f32 %v894, %v895
    %v897 = vsub.f32 1.0, %v896
    %v898 = vmul.f32 %v895, %v897
    %v899 = vadd.f32 %v895, %v898
    %vm900 = vweird.f32 %v894
    %vm901 = vweird.f32 %v895
    %vm902 = vmor %vm900, %vm901
    %v903 = vsel %vm902, %v895, %v899
    %v904 = vand.u32 2147483647, %v894
    %vm905 = vcmp.eq.f32.partialorder %v904, 8.507059e+37
    %v906 = vand.u32 %v894, 2147483648
    %v907 = vor.u32 1.1754944e-38, %v906
    %v908 = vsel %vm905, %v907, %v903
    %v909 = vmul.f32 1.0, %v908
    %v910 = vadd.f32 %v888, %v267
    %912 = vrot.lane.b32.xlu0 %v910, 64
    %v913 = vpop.permute.xlu0 %912
    %v915 = vmul.f32 %v909, %v913
    %917 = vrot.lane.b32.xlu0 %v915, 64
    %v918 = vpop.permute.xlu0 %917
    %v920 = vadd.f32 %v866, %v918
    %v921 = vtanh.pop %v920
    %v922 = vsub.f32 %v773, %v921
    %924 = vrot.lane.b32.xlu0 %v922, 96
    %v925 = vpop.permute.xlu0 %924
    %v927 = vmul.f32 %v909, %v925
    %929 = vrot.lane.b32.xlu0 %v927, 32
    %v930 = vpop.permute.xlu0 %929
    %v932 = vadd.f32 %v921, %v930
    %934 = vrot.lane.b32.xlu0 %v932, 64
    %v935 = vpop.permute.xlu0 %934
    %937 = vst.msk [vmem:[#allocation6 + $0x8] sm:$0x3] %vm300, %v935
    %v938 = vld [vmem:[#allocation2 + $0xa] sm:$0x3]
    %939 = vmatpush.msra.mxu0 0.0
    %940 = vmatpush.msra.mxu0 0.0
    %941 = vmatpush.msra.mxu0 0.0
    %942 = vmatpush.msra.mxu0 0.0
    %943 = vmatpush.msra.mxu0 0.0
    %944 = vmatpush.msra.mxu0 0.0
    %945 = vmatpush.msra.mxu0 0.0
    %946 = vmatpush.msra.mxu0 0.0
    %947 = vmatpush.msra.mxu0 0.0
    %948 = vmatpush.msra.mxu0 0.0
    %949 = vmatpush.msra.mxu0 0.0
    %950 = vmatpush.msra.mxu0 0.0
    %951 = vmatpush.msra.mxu0 %v99
    %952 = vmatpush.msra.mxu0 %v98
    %953 = vmatpush.msra.mxu0 %v97
    %954 = vmatpush.msra.mxu0 %v96
    %955 = vmatmul.f32.gmra.mxu0 %v846
    %v956 = vpop.f32.mrf.mxu0
    %v957 = vadd.f32 0.0, %v956
    %958 = vdwg.mxu0
    %v959 = vadd.f32 %v938, %v957
    %v960 = vxor.u32 %v959, 2147483648
    %v961 = vmul.f32 %v960, 1.442695
    %v962 = vpow.pop %v961
    %v963 = vadd.f32 %v962, 1.0
    %v964 = vrcp.pop %v963
    %v965 = vmul.f32 %v963, %v964
    %v966 = vsub.f32 1.0, %v965
    %v967 = vmul.f32 %v964, %v966
    %v968 = vadd.f32 %v964, %v967
    %vm969 = vweird.f32 %v963
    %vm970 = vweird.f32 %v964
    %vm971 = vmor %vm969, %vm970
    %v972 = vsel %vm971, %v964, %v968
    %v973 = vand.u32 2147483647, %v963
    %vm974 = vcmp.eq.f32.partialorder %v973, 8.507059e+37
    %v975 = vand.u32 %v963, 2147483648
    %v976 = vor.u32 1.1754944e-38, %v975
    %v977 = vsel %vm974, %v976, %v972
    %v978 = vmul.f32 1.0, %v977
    %v979 = vadd.f32 %v957, %v164
    %981 = vrot.lane.b32.xlu0 %v979, 64
    %v982 = vpop.permute.xlu0 %981
    %v984 = vmul.f32 %v978, %v982
    %986 = vrot.lane.b32.xlu0 %v984, 64
    %v987 = vpop.permute.xlu0 %986
    %v989 = vadd.f32 %v938, %v987
    %v990 = vtanh.pop %v989
    %v991 = vsub.f32 %v842, %v990
    %993 = vrot.lane.b32.xlu0 %v991, 96
    %v994 = vpop.permute.xlu0 %993
    %v996 = vmul.f32 %v978, %v994
    %998 = vrot.lane.b32.xlu0 %v996, 32
    %v999 = vpop.permute.xlu0 %998
    %v1001 = vadd.f32 %v990, %v999
    %1003 = vrot.lane.b32.xlu0 %v1001, 64
    %v1004 = vpop.permute.xlu0 %1003
    %v1005 = vsel %vm117, %v1004, 0
    %1007 = vmatpush.msra.mxu0 0.0
    %1008 = vmatpush.msra.mxu0 0.0
    %1009 = vmatpush.msra.mxu0 0.0
    %1010 = vmatpush.msra.mxu0 0.0
    %1011 = vmatpush.msra.mxu0 0.0
    %1012 = vmatpush.msra.mxu0 0.0
    %1013 = vmatpush.msra.mxu0 0.0
    %1014 = vmatpush.msra.mxu0 0.0
    %1015 = vmatpush.msra.mxu0 0.0
    %1016 = vmatpush.msra.mxu0 0.0
    %1017 = vmatpush.msra.mxu0 0.0
    %1018 = vmatpush.msra.mxu0 0.0
    %1019 = vmatpush.msra.mxu0 %v111
    %1020 = vmatpush.msra.mxu0 %v110
    %1021 = vmatpush.msra.mxu0 %v109
    %1022 = vmatpush.msra.mxu0 %v108
    %1023 = vmatmul.f32.gmra.mxu0 %v1005
    %v1024 = vpop.f32.mrf.mxu0
    %v1025 = vadd.f32 %v194, %v1024
    %1026 = vdwg.mxu0
    %v1027 = vsel %vm117, %v935, 0
    %1029 = vmatpush.msra.mxu0 0.0
    %1030 = vmatpush.msra.mxu0 0.0
    %1031 = vmatpush.msra.mxu0 0.0
    %1032 = vmatpush.msra.mxu0 0.0
    %1033 = vmatpush.msra.mxu0 0.0
    %1034 = vmatpush.msra.mxu0 0.0
    %1035 = vmatpush.msra.mxu0 0.0
    %1036 = vmatpush.msra.mxu0 0.0
    %1037 = vmatpush.msra.mxu0 0.0
    %1038 = vmatpush.msra.mxu0 0.0
    %1039 = vmatpush.msra.mxu0 0.0
    %1040 = vmatpush.msra.mxu0 0.0
    %1041 = vmatpush.msra.mxu0 %v104
    %1042 = vmatpush.msra.mxu0 %v103
    %1043 = vmatpush.msra.mxu0 %v102
    %1044 = vmatpush.msra.mxu0 %v101
    %1045 = vmatmul.f32.gmra.mxu0 %v1027
    %v1046 = vpop.f32.mrf.mxu0
    %v1047 = vadd.f32 0.0, %v1046
    %1048 = vdwg.mxu0
    %v1049 = vadd.f32 %v1025, %v1047
    %v1050 = vxor.u32 %v1049, 2147483648
    %v1051 = vmul.f32 %v1050, 1.442695
    %v1052 = vpow.pop %v1051
    %v1053 = vadd.f32 %v1052, 1.0
    %v1054 = vrcp.pop %v1053
    %v1055 = vmul.f32 %v1053, %v1054
    %v1056 = vsub.f32 1.0, %v1055
    %v1057 = vmul.f32 %v1054, %v1056
    %v1058 = vadd.f32 %v1054, %v1057
    %vm1059 = vweird.f32 %v1053
    %vm1060 = vweird.f32 %v1054
    %vm1061 = vmor %vm1059, %vm1060
    %v1062 = vsel %vm1061, %v1054, %v1058
    %v1063 = vand.u32 2147483647, %v1053
    %vm1064 = vcmp.eq.f32.partialorder %v1063, 8.507059e+37
    %v1065 = vand.u32 %v1053, 2147483648
    %v1066 = vor.u32 1.1754944e-38, %v1065
    %v1067 = vsel %vm1064, %v1066, %v1062
    %v1068 = vmul.f32 1.0, %v1067
    %v1069 = vadd.f32 %v1047, %v267
    %1071 = vrot.lane.b32.xlu0 %v1069, 64
    %v1072 = vpop.permute.xlu0 %1071
    %v1074 = vmul.f32 %v1068, %v1072
    %1076 = vrot.lane.b32.xlu0 %v1074, 64
    %v1077 = vpop.permute.xlu0 %1076
    %v1079 = vadd.f32 %v1025, %v1077
    %v1080 = vtanh.pop %v1079
    %v1081 = vsub.f32 %v932, %v1080
    %1083 = vrot.lane.b32.xlu0 %v1081, 96
    %v1084 = vpop.permute.xlu0 %1083
    %v1086 = vmul.f32 %v1068, %v1084
    %1088 = vrot.lane.b32.xlu0 %v1086, 32
    %v1089 = vpop.permute.xlu0 %1088
    %v1091 = vadd.f32 %v1080, %v1089
    %1093 = vrot.lane.b32.xlu0 %v1091, 64
    %v1094 = vpop.permute.xlu0 %1093
    %1096 = vst.msk [vmem:[#allocation6 + $0xa] sm:$0x3] %vm300, %v1094
    %v1097 = vld [vmem:[#allocation2 + $0xc] sm:$0x3]
    %1098 = vmatpush.msra.mxu0 0.0
    %1099 = vmatpush.msra.mxu0 0.0
    %1100 = vmatpush.msra.mxu0 0.0
    %1101 = vmatpush.msra.mxu0 0.0
    %1102 = vmatpush.msra.mxu0 0.0
    %1103 = vmatpush.msra.mxu0 0.0
    %1104 = vmatpush.msra.mxu0 0.0
    %1105 = vmatpush.msra.mxu0 0.0
    %1106 = vmatpush.msra.mxu0 0.0
    %1107 = vmatpush.msra.mxu0 0.0
    %1108 = vmatpush.msra.mxu0 0.0
    %1109 = vmatpush.msra.mxu0 0.0
    %1110 = vmatpush.msra.mxu0 %v99
    %1111 = vmatpush.msra.mxu0 %v98
    %1112 = vmatpush.msra.mxu0 %v97
    %1113 = vmatpush.msra.mxu0 %v96
    %1114 = vmatmul.f32.gmra.mxu0 %v1005
    %v1115 = vpop.f32.mrf.mxu0
    %v1116 = vadd.f32 0.0, %v1115
    %1117 = vdwg.mxu0
    %v1118 = vadd.f32 %v1097, %v1116
    %v1119 = vxor.u32 %v1118, 2147483648
    %v1120 = vmul.f32 %v1119, 1.442695
    %v1121 = vpow.pop %v1120
    %v1122 = vadd.f32 %v1121, 1.0
    %v1123 = vrcp.pop %v1122
    %v1124 = vmul.f32 %v1122, %v1123
    %v1125 = vsub.f32 1.0, %v1124
    %v1126 = vmul.f32 %v1123, %v1125
    %v1127 = vadd.f32 %v1123, %v1126
    %vm1128 = vweird.f32 %v1122
    %vm1129 = vweird.f32 %v1123
    %vm1130 = vmor %vm1128, %vm1129
    %v1131 = vsel %vm1130, %v1123, %v1127
    %v1132 = vand.u32 2147483647, %v1122
    %vm1133 = vcmp.eq.f32.partialorder %v1132, 8.507059e+37
    %v1134 = vand.u32 %v1122, 2147483648
    %v1135 = vor.u32 1.1754944e-38, %v1134
    %v1136 = vsel %vm1133, %v1135, %v1131
    %v1137 = vmul.f32 1.0, %v1136
    %v1138 = vadd.f32 %v1116, %v164
    %1140 = vrot.lane.b32.xlu0 %v1138, 64
    %v1141 = vpop.permute.xlu0 %1140
    %v1143 = vmul.f32 %v1137, %v1141
    %1145 = vrot.lane.b32.xlu0 %v1143, 64
    %v1146 = vpop.permute.xlu0 %1145
    %v1148 = vadd.f32 %v1097, %v1146
    %v1149 = vtanh.pop %v1148
    %v1150 = vsub.f32 %v1001, %v1149
    %1152 = vrot.lane.b32.xlu0 %v1150, 96
    %v1153 = vpop.permute.xlu0 %1152
    %v1155 = vmul.f32 %v1137, %v1153
    %1157 = vrot.lane.b32.xlu0 %v1155, 32
    %v1158 = vpop.permute.xlu0 %1157
    %v1160 = vadd.f32 %v1149, %v1158
    %1162 = vrot.lane.b32.xlu0 %v1160, 64
    %v1163 = vpop.permute.xlu0 %1162
    %v1164 = vsel %vm117, %v1163, 0
    %1166 = vmatpush.msra.mxu0 0.0
    %1167 = vmatpush.msra.mxu0 0.0
    %1168 = vmatpush.msra.mxu0 0.0
    %1169 = vmatpush.msra.mxu0 0.0
    %1170 = vmatpush.msra.mxu0 0.0
    %1171 = vmatpush.msra.mxu0 0.0
    %1172 = vmatpush.msra.mxu0 0.0
    %1173 = vmatpush.msra.mxu0 0.0
    %1174 = vmatpush.msra.mxu0 0.0
    %1175 = vmatpush.msra.mxu0 0.0
    %1176 = vmatpush.msra.mxu0 0.0
    %1177 = vmatpush.msra.mxu0 0.0
    %1178 = vmatpush.msra.mxu0 %v111
    %1179 = vmatpush.msra.mxu0 %v110
    %1180 = vmatpush.msra.mxu0 %v109
    %1181 = vmatpush.msra.mxu0 %v108
    %1182 = vmatmul.f32.gmra.mxu0 %v1164
    %v1183 = vpop.f32.mrf.mxu0
    %v1184 = vadd.f32 %v194, %v1183
    %1185 = vdwg.mxu0
    %v1186 = vsel %vm117, %v1094, 0
    %1188 = vmatpush.msra.mxu0 0.0
    %1189 = vmatpush.msra.mxu0 0.0
    %1190 = vmatpush.msra.mxu0 0.0
    %1191 = vmatpush.msra.mxu0 0.0
    %1192 = vmatpush.msra.mxu0 0.0
    %1193 = vmatpush.msra.mxu0 0.0
    %1194 = vmatpush.msra.mxu0 0.0
    %1195 = vmatpush.msra.mxu0 0.0
    %1196 = vmatpush.msra.mxu0 0.0
    %1197 = vmatpush.msra.mxu0 0.0
    %1198 = vmatpush.msra.mxu0 0.0
    %1199 = vmatpush.msra.mxu0 0.0
    %1200 = vmatpush.msra.mxu0 %v104
    %1201 = vmatpush.msra.mxu0 %v103
    %1202 = vmatpush.msra.mxu0 %v102
    %1203 = vmatpush.msra.mxu0 %v101
    %1204 = vmatmul.f32.gmra.mxu0 %v1186
    %v1205 = vpop.f32.mrf.mxu0
    %v1206 = vadd.f32 0.0, %v1205
    %1207 = vdwg.mxu0
    %v1208 = vadd.f32 %v1184, %v1206
    %v1209 = vxor.u32 %v1208, 2147483648
    %v1210 = vmul.f32 %v1209, 1.442695
    %v1211 = vpow.pop %v1210
    %v1212 = vadd.f32 %v1211, 1.0
    %v1213 = vrcp.pop %v1212
    %v1214 = vmul.f32 %v1212, %v1213
    %v1215 = vsub.f32 1.0, %v1214
    %v1216 = vmul.f32 %v1213, %v1215
    %v1217 = vadd.f32 %v1213, %v1216
    %vm1218 = vweird.f32 %v1212
    %vm1219 = vweird.f32 %v1213
    %vm1220 = vmor %vm1218, %vm1219
    %v1221 = vsel %vm1220, %v1213, %v1217
    %v1222 = vand.u32 2147483647, %v1212
    %vm1223 = vcmp.eq.f32.partialorder %v1222, 8.507059e+37
    %v1224 = vand.u32 %v1212, 2147483648
    %v1225 = vor.u32 1.1754944e-38, %v1224
    %v1226 = vsel %vm1223, %v1225, %v1221
    %v1227 = vmul.f32 1.0, %v1226
    %v1228 = vadd.f32 %v1206, %v267
    %1230 = vrot.lane.b32.xlu0 %v1228, 64
    %v1231 = vpop.permute.xlu0 %1230
    %v1233 = vmul.f32 %v1227, %v1231
    %1235 = vrot.lane.b32.xlu0 %v1233, 64
    %v1236 = vpop.permute.xlu0 %1235
    %v1238 = vadd.f32 %v1184, %v1236
    %v1239 = vtanh.pop %v1238
    %v1240 = vsub.f32 %v1091, %v1239
    %1242 = vrot.lane.b32.xlu0 %v1240, 96
    %v1243 = vpop.permute.xlu0 %1242
    %v1245 = vmul.f32 %v1227, %v1243
    %1247 = vrot.lane.b32.xlu0 %v1245, 32
    %v1248 = vpop.permute.xlu0 %1247
    %v1250 = vadd.f32 %v1239, %v1248
    %1252 = vrot.lane.b32.xlu0 %v1250, 64
    %v1253 = vpop.permute.xlu0 %1252
    %1255 = vst.msk [vmem:[#allocation6 + $0xc] sm:$0x3] %vm300, %v1253
    %v1256 = vld [vmem:[#allocation2 + $0xe] sm:$0x3]
    %1257 = vmatpush.msra.mxu0 0.0
    %1258 = vmatpush.msra.mxu0 0.0
    %1259 = vmatpush.msra.mxu0 0.0
    %1260 = vmatpush.msra.mxu0 0.0
    %1261 = vmatpush.msra.mxu0 0.0
    %1262 = vmatpush.msra.mxu0 0.0
    %1263 = vmatpush.msra.mxu0 0.0
    %1264 = vmatpush.msra.mxu0 0.0
    %1265 = vmatpush.msra.mxu0 0.0
    %1266 = vmatpush.msra.mxu0 0.0
    %1267 = vmatpush.msra.mxu0 0.0
    %1268 = vmatpush.msra.mxu0 0.0
    %1269 = vmatpush.msra.mxu0 %v99
    %1270 = vmatpush.msra.mxu0 %v98
    %1271 = vmatpush.msra.mxu0 %v97
    %1272 = vmatpush.msra.mxu0 %v96
    %1273 = vmatmul.f32.gmra.mxu0 %v1164
    %v1274 = vpop.f32.mrf.mxu0
    %v1275 = vadd.f32 0.0, %v1274
    %1276 = vdwg.mxu0
    %v1277 = vadd.f32 %v1256, %v1275
    %v1278 = vxor.u32 %v1277, 2147483648
    %v1279 = vmul.f32 %v1278, 1.442695
    %v1280 = vpow.pop %v1279
    %v1281 = vadd.f32 %v1280, 1.0
    %v1282 = vrcp.pop %v1281
    %v1283 = vmul.f32 %v1281, %v1282
    %v1284 = vsub.f32 1.0, %v1283
    %v1285 = vmul.f32 %v1282, %v1284
    %v1286 = vadd.f32 %v1282, %v1285
    %vm1287 = vweird.f32 %v1281
    %vm1288 = vweird.f32 %v1282
    %vm1289 = vmor %vm1287, %vm1288
    %v1290 = vsel %vm1289, %v1282, %v1286
    %v1291 = vand.u32 2147483647, %v1281
    %vm1292 = vcmp.eq.f32.partialorder %v1291, 8.507059e+37
    %v1293 = vand.u32 %v1281, 2147483648
    %v1294 = vor.u32 1.1754944e-38, %v1293
    %v1295 = vsel %vm1292, %v1294, %v1290
    %v1296 = vmul.f32 1.0, %v1295
    %v1297 = vadd.f32 %v1275, %v164
    %1299 = vrot.lane.b32.xlu0 %v1297, 64
    %v1300 = vpop.permute.xlu0 %1299
    %v1302 = vmul.f32 %v1296, %v1300
    %1304 = vrot.lane.b32.xlu0 %v1302, 64
    %v1305 = vpop.permute.xlu0 %1304
    %v1307 = vadd.f32 %v1256, %v1305
    %v1308 = vtanh.pop %v1307
    %v1309 = vsub.f32 %v1160, %v1308
    %1311 = vrot.lane.b32.xlu0 %v1309, 96
    %v1312 = vpop.permute.xlu0 %1311
    %v1314 = vmul.f32 %v1296, %v1312
    %1316 = vrot.lane.b32.xlu0 %v1314, 32
    %v1317 = vpop.permute.xlu0 %1316
    %v1319 = vadd.f32 %v1308, %v1317
    %1321 = vrot.lane.b32.xlu0 %v1319, 64
    %v1322 = vpop.permute.xlu0 %1321
    %v1323 = vsel %vm117, %v1322, 0
    %1325 = vmatpush.msra.mxu0 0.0
    %1326 = vmatpush.msra.mxu0 0.0
    %1327 = vmatpush.msra.mxu0 0.0
    %1328 = vmatpush.msra.mxu0 0.0
    %1329 = vmatpush.msra.mxu0 0.0
    %1330 = vmatpush.msra.mxu0 0.0
    %1331 = vmatpush.msra.mxu0 0.0
    %1332 = vmatpush.msra.mxu0 0.0
    %1333 = vmatpush.msra.mxu0 0.0
    %1334 = vmatpush.msra.mxu0 0.0
    %1335 = vmatpush.msra.mxu0 0.0
    %1336 = vmatpush.msra.mxu0 0.0
    %1337 = vmatpush.msra.mxu0 %v111
    %1338 = vmatpush.msra.mxu0 %v110
    %1339 = vmatpush.msra.mxu0 %v109
    %1340 = vmatpush.msra.mxu0 %v108
    %1341 = vmatmul.f32.gmra.mxu0 %v1323
    %v1342 = vpop.f32.mrf.mxu0
    %v1343 = vadd.f32 %v194, %v1342
    %1344 = vdwg.mxu0
    %v1345 = vsel %vm117, %v1253, 0
    %1347 = vmatpush.msra.mxu0 0.0
    %1348 = vmatpush.msra.mxu0 0.0
    %1349 = vmatpush.msra.mxu0 0.0
    %1350 = vmatpush.msra.mxu0 0.0
    %1351 = vmatpush.msra.mxu0 0.0
    %1352 = vmatpush.msra.mxu0 0.0
    %1353 = vmatpush.msra.mxu0 0.0
    %1354 = vmatpush.msra.mxu0 0.0
    %1355 = vmatpush.msra.mxu0 0.0
    %1356 = vmatpush.msra.mxu0 0.0
    %1357 = vmatpush.msra.mxu0 0.0
    %1358 = vmatpush.msra.mxu0 0.0
    %1359 = vmatpush.msra.mxu0 %v104
    %1360 = vmatpush.msra.mxu0 %v103
    %1361 = vmatpush.msra.mxu0 %v102
    %1362 = vmatpush.msra.mxu0 %v101
    %1363 = vmatmul.f32.gmra.mxu0 %v1345
    %v1364 = vpop.f32.mrf.mxu0
    %v1365 = vadd.f32 0.0, %v1364
    %1366 = vdwg.mxu0
    %v1367 = vadd.f32 %v1343, %v1365
    %v1368 = vxor.u32 %v1367, 2147483648
    %v1369 = vmul.f32 %v1368, 1.442695
    %v1370 = vpow.pop %v1369
    %v1371 = vadd.f32 %v1370, 1.0
    %v1372 = vrcp.pop %v1371
    %v1373 = vmul.f32 %v1371, %v1372
    %v1374 = vsub.f32 1.0, %v1373
    %v1375 = vmul.f32 %v1372, %v1374
    %v1376 = vadd.f32 %v1372, %v1375
    %vm1377 = vweird.f32 %v1371
    %vm1378 = vweird.f32 %v1372
    %vm1379 = vmor %vm1377, %vm1378
    %v1380 = vsel %vm1379, %v1372, %v1376
    %v1381 = vand.u32 2147483647, %v1371
    %vm1382 = vcmp.eq.f32.partialorder %v1381, 8.507059e+37
    %v1383 = vand.u32 %v1371, 2147483648
    %v1384 = vor.u32 1.1754944e-38, %v1383
    %v1385 = vsel %vm1382, %v1384, %v1380
    %v1386 = vmul.f32 1.0, %v1385
    %v1387 = vadd.f32 %v1365, %v267
    %1389 = vrot.lane.b32.xlu0 %v1387, 64
    %v1390 = vpop.permute.xlu0 %1389
    %v1392 = vmul.f32 %v1386, %v1390
    %1394 = vrot.lane.b32.xlu0 %v1392, 64
    %v1395 = vpop.permute.xlu0 %1394
    %v1397 = vadd.f32 %v1343, %v1395
    %v1398 = vtanh.pop %v1397
    %v1399 = vsub.f32 %v1250, %v1398
    %1401 = vrot.lane.b32.xlu0 %v1399, 96
    %v1402 = vpop.permute.xlu0 %1401
    %v1404 = vmul.f32 %v1386, %v1402
    %1406 = vrot.lane.b32.xlu0 %v1404, 32
    %v1407 = vpop.permute.xlu0 %1406
    %v1409 = vadd.f32 %v1398, %v1407
    %1411 = vrot.lane.b32.xlu0 %v1409, 64
    %v1412 = vpop.permute.xlu0 %1411
    %1414 = vst.msk [vmem:[#allocation6 + $0xe] sm:$0x3] %vm300, %v1412
    %1416 = vst.msk [vmem:[#allocation7] sm:$0x3] %vm300, %v1322
    %s1417 = scalar_lea.vmem [#allocation7], 2
    %1418 = vst.msk [vmem:[%s1417] sm:$0x3] %vm300, %v1412
    %v1419 = vld [vmem:[#allocation6] sm:$0xff]
    %v1420 = vld [vmem:[#allocation6 + $0x8] sm:$0xff]
    %v1421 = vld [vmem:[%s8] sm:$0xff]
    %v1422 = vld [vmem:[%s8 + $0x8] sm:$0xff]
    %v1423 = vld [vmem:[%s8 + $0x10] sm:$0xff]
    %v1424 = vld [vmem:[%s8 + $0x18] sm:$0xff]
    %v1425 = vld [vmem:[%s9] sm:$0x1]
    %v1427 = vperm.slane %v1425, 0
    %v1430 = vsel %vm117, %v1419, 0
    %v1433 = vsel %vm117, %v1420, 0
    %1435 = vmatpush.msra.mxu0 0.0
    %1436 = vmatpush.msra.mxu0 0.0
    %1437 = vmatpush.msra.mxu0 0.0
    %1438 = vmatpush.msra.mxu0 0.0
    %1439 = vmatpush.msra.mxu0 0.0
    %1440 = vmatpush.msra.mxu0 0.0
    %1441 = vmatpush.msra.mxu0 0.0
    %1442 = vmatpush.msra.mxu0 0.0
    %1443 = vmatpush.msra.mxu0 0.0
    %1444 = vmatpush.msra.mxu0 0.0
    %1445 = vmatpush.msra.mxu0 0.0
    %1446 = vmatpush.msra.mxu0 0.0
    %1447 = vmatpush.msra.mxu0 %v1424
    %1448 = vmatpush.msra.mxu0 %v1423
    %1449 = vmatpush.msra.mxu0 %v1422
    %1450 = vmatpush.msra.mxu0 %v1421
    %1451 = vmatmul.f32.gmra.mxu0 %v1430
    %v1452 = vpop.f32.mrf.mxu0
    %v1453 = vadd.f32 %v1427, %v1452
    %1454 = vmatmul.f32.gmra.mxu0 %v1433
    %v1455 = vpop.f32.mrf.mxu0
    %v1456 = vadd.f32 %v1427, %v1455
    %1457 = vdwg.mxu0
    %1458 = vst.msk [vmem:[%s10] sm:$0xff] %vm63, %v1453
    %1459 = vst.msk [vmem:[%s10 + $0x8] sm:$0xff] %vm63, %v1456
    // Predicated region
    $region46: #{tpu_custom_call.1} parent=1 // pred_check
      _
    $region47: #{tpu_custom_call.1} parent=1 // pred_check_branch
      %1461 = sbr.rel (0) target = $region49
    $region48: #{tpu_custom_call.1} parent=1 // pred_region
      _
    $region49: #{tpu_custom_call.1} parent=1 // pred_fallthru
      _
    // Predicated region
    $region50: #{tpu_custom_call.1} parent=1 // pred_check
      _
    $region51: #{tpu_custom_call.1} parent=1 // pred_check_branch
      %1463 = sbr.rel (0) target = $region53
    $region52: #{tpu_custom_call.1} parent=1 // pred_region
      %1465 = vsyncadd [#allocation5], 0
      %s1466 = sshll.u32 [#allocation6], 4
      %s1467 = int_to_ptr.vmem [resolvable:$true] %s1466
      %s1468 = sshll.u32 %s11, 4
      %s1469 = int_to_ptr.hbm [resolvable:$true] %s1468
      %1474 = dma.vmem_to_hbm [thread:$0]  %s1467, 256, %s1469, [#allocation5], 128, 128, 8
    $region53: #{tpu_custom_call.1} parent=1 // pred_fallthru
      _
    // Predicated region
    $region54: #{tpu_custom_call.1} parent=1 // pred_check
      _
    $region55: #{tpu_custom_call.1} parent=1 // pred_check_branch
      %1476 = sbr.rel (0) target = $region57
    $region56: #{tpu_custom_call.1} parent=1 // pred_region
      %1478 = vsyncadd [#allocation8], 0
      %s1479 = sshll.u32 [#allocation7], 4
      %s1480 = int_to_ptr.vmem [resolvable:$true] %s1479
      %s1481 = sshll.u32 %s12, 4
      %s1482 = int_to_ptr.hbm [resolvable:$true] %s1481
      %1487 = dma.vmem_to_hbm [thread:$0]  %s1480, 64, %s1482, [#allocation8], 32, 32, 2
    $region57: #{tpu_custom_call.1} parent=1 // pred_fallthru
      _
    // Predicated region
    $region58: #{tpu_custom_call.1} parent=1 // pred_check
      _
    $region59: #{tpu_custom_call.1} parent=1 // pred_check_branch
      %1489 = sbr.rel (0) target = $region61
    $region60: #{tpu_custom_call.1} parent=1 // pred_region
      _
    $region61: #{tpu_custom_call.1} parent=1 // pred_fallthru
      _
    // Predicated region
    $region62: #{tpu_custom_call.1} parent=1 // pred_check
      _
    $region63: #{tpu_custom_call.1} parent=1 // pred_check_branch
      %1491 = sbr.rel (0) target = $region65
    $region64: #{tpu_custom_call.1} parent=1 // pred_region
      %1493 = dma.done [#allocation5], 256
    $region65: #{tpu_custom_call.1} parent=1 // pred_fallthru
      _
    // Predicated region
    $region66: #{tpu_custom_call.1} parent=1 // pred_check
      _
    $region67: #{tpu_custom_call.1} parent=1 // pred_check_branch
      %1495 = sbr.rel (0) target = $region69
    $region68: #{tpu_custom_call.1} parent=1 // pred_region
      %1497 = dma.done [#allocation8], 64
    $region69: #{tpu_custom_call.1} parent=1 // pred_fallthru
      _
    %1498 = vsyncpa [#allocation4], 1
    %1499 = vsyncpa [#allocation5], 1
    %1500 = vsyncpa [#allocation8], 1

</llo_original>
